<compile_context>
chip_gen: v7x
topology: tpu7x:2x2x1
jax: 0.10.0
libtpu: 0.0.40
codegen_flags: <defaults>
</compile_context>

<pallas_src>
import functools

import jax
import jax.numpy as jnp
import numpy as np
from jax.experimental import pallas as pl
from jax.experimental.pallas import tpu as pltpu


# ------------------------------ activation -----------------------------------

def _quad(y):
    # activation_quad: 0.125*x^2 + 0.25*x + 0.5
    return 0.125 * y * y + 0.25 * y + 0.5


# --------------------- host-side (numpy) one-time precomputes ----------------

def _e_col_perm(I, S, H):
    """Column permutation applied to the weight that PRODUCES the mix input.

    New column h*dh + (g*S + s') holds old column h*dh + (G*s' + g), so the
    mix-output (carrier) rows come out ordered (g, s') and the carrier can be
    consumed by the next matmul with contiguous, aligned slices only.
    """
    dh = I // H
    SH = S * H
    G = I // SH
    perm = np.empty(I, dtype=np.int64)
    for h in range(H):
        for g in range(G):
            for sp in range(S):
                perm[h * dh + g * S + sp] = h * dh + G * sp + g
    return perm


def _make_mbig(M):
    """Fold per-head mix + output scramble into one [H*S, S*H] block matrix.

    Mbig[h*S + s, t*H + h] = M[h, s, t]   (zero elsewhere), so the whole
    multi-head mix is a single (dh, H*S) @ (H*S, S*H) contraction.
    """
    M = np.asarray(M, np.float32)
    H, S, _ = M.shape
    out = np.zeros((H * S, S * H), np.float32)
    for h in range(H):
        out[h * S:(h + 1) * S, h::H] = M[h]
    return out


def _make_bias_carrier(b, S, H):
    """Bias [I] in carrier-row order: biasc[g*S + s', r] = b[g*S*H + r]."""
    b = np.asarray(b, np.float32)
    I = b.shape[0]
    SH = S * H
    G = I // SH
    dh = I // H
    return np.repeat(b.reshape(G, 1, SH), S, axis=1).reshape(dh, SH)


def prepare_params(params, num_heads, seq_len):
    """One-time host packing of the flattened-BERT weights (numpy, not jitted)."""
    S, H = seq_len, num_heads
    bgin_w = np.asarray(params["bgin_w"], np.float32)       # [d, I]
    d = bgin_w.shape[0]
    I = bgin_w.shape[1]
    SH = S * H
    assert I % H == 0 and I % SH == 0, "kernel packing requires I % (S*H) == 0"
    perm = _e_col_perm(I, S, H)

    mbig = [_make_mbig(params["bgin_M"])] + [_make_mbig(M) for M in params["M"]]
    biasc = [_make_bias_carrier(params["bgin_b"], S, H)] + \
            [_make_bias_carrier(b, S, H) for b in params["bias"]]

    n_mid = len(params["weight1"])
    if n_mid > 0:
        w1 = np.stack([np.asarray(w, np.float32) for w in params["weight1"]])         # [L-1, I, d]
        w2 = np.stack([np.asarray(w, np.float32)[:, perm] for w in params["weight2"]])  # [L-1, d, I]
    else:  # dummy (unused) operands so the kernel signature stays fixed
        w1 = np.zeros((1, I, d), np.float32)
        w2 = np.zeros((1, d, I), np.float32)

    prep = dict(
        bgin_w=jnp.asarray(bgin_w[:, perm]),
        w1=jnp.asarray(w1),
        w2=jnp.asarray(w2),
        mbig=jnp.asarray(np.stack(mbig)),        # [L, H*S, S*H]
        biasc=jnp.asarray(np.stack(biasc)),      # [L, dh,  S*H]
        last_w=jnp.asarray(np.asarray(params["last_w"], np.float32)),       # [I, d]
        last_b=jnp.asarray(np.asarray(params["last_b"], np.float32).reshape(1, -1)),
    )
    return prep, n_mid


# --------------------------------- kernel ------------------------------------

def _bert_flatten_kernel(x_ref, bgin_w_ref, w1_ref, w2_ref, last_w_ref,
                         last_b_ref, mbig_ref, biasc_ref, o_ref,
                         v_scr, c_scr, *, num_heads, num_mid, batch, seq):
    """Entire flattened-BERT forward for the whole batch in one invocation."""
    H, B, S = num_heads, batch, seq
    I = bgin_w_ref.shape[1]
    dh = I // H
    SH = S * H
    G = I // SH

    def mix_bias_quad(u, layer):
        """u: [B*S, I] (e-permuted columns).  Multi-head mix (+ folded output
        scramble) -> +bias -> quad, result left in carrier slabs
        c_scr[g] == std_activation[:, g*SH:(g+1)*SH]."""
        mbig = mbig_ref[layer]      # [H*S, S*H]
        bias = biasc_ref[layer]     # [dh,  S*H]
        for b in range(B):          # static loop, B=2
            # gather this batch's head blocks along the contraction axis
            for h in range(H):
                v_scr[h * S:(h + 1) * S, :] = u[b * S:(b + 1) * S,
                                                h * dh:(h + 1) * dh]
            xr = v_scr[...].T       # [dh, H*S] -- single 2-D transpose
            carrier = jnp.dot(xr, mbig, preferred_element_type=jnp.float32)
            z = _quad(carrier + bias)                        # [dh, S*H]
            for g in range(G):
                c_scr[g, b * S:(b + 1) * S, :] = z[g * S:(g + 1) * S, :]

    def consume(w):
        """Contract the standard-layout activation (held as G carrier slabs)
        against w: [I, K] -> [B*S, K].  Whole batch, aligned slices only."""
        acc = jnp.dot(c_scr[0], w[0:SH, :], preferred_element_type=jnp.float32)
        for g in range(1, G):
            acc = acc + jnp.dot(c_scr[g], w[g * SH:(g + 1) * SH, :],
                                preferred_element_type=jnp.float32)
        return acc

    # ---- begin layer: x @ bgin_w -> mix -> +bias -> quad ----
    u = jnp.dot(x_ref[...], bgin_w_ref[...], preferred_element_type=jnp.float32)
    mix_bias_quad(u, 0)

    # ---- middle layers: @ w1 -> @ w2 -> mix -> +bias -> quad ----
    for l in range(num_mid):
        p = consume(w1_ref[l])                                           # [B*S, d]
        u = jnp.dot(p, w2_ref[l], preferred_element_type=jnp.float32)    # [B*S, I]
        mix_bias_quad(u, l + 1)

    # ---- final projection: @ last_w + last_b (no activation) ----
    o_ref[...] = consume(last_w_ref[...]) + last_b_ref[...]


# --------------------------------- wrappers ----------------------------------

def bert_embeddings(token_ids, params):
    """Standard BertEmbeddings: word + position + token-type, then LayerNorm."""
    S = token_ids.shape[1]
    h = (params["word_emb"][token_ids]
         + params["pos_emb"][jnp.arange(S)][None, :, :]
         + params["type_emb"][0][None, None, :])
    mu = h.mean(-1, keepdims=True)
    var = ((h - mu) ** 2).mean(-1, keepdims=True)
    h = (h - mu) / jnp.sqrt(var + 1e-12)
    return h * params["ln_gamma"] + params["ln_beta"]


def bert_base_flatten_forward(token_ids, emb_params, prep, *, num_heads, num_mid):
    x = bert_embeddings(token_ids, emb_params)           # [B, S, d]
    B, S, d = x.shape
    I = prep["bgin_w"].shape[1]
    H = num_heads
    dh = I // H
    SH = S * H
    G = I // SH

    kernel = functools.partial(_bert_flatten_kernel, num_heads=H,
                               num_mid=num_mid, batch=B, seq=S)
    out2d = pl.pallas_call(
        kernel,
        out_shape=jax.ShapeDtypeStruct((B * S, d), jnp.float32),
        # no grid: one invocation, all operands resident in VMEM (defaults)
        scratch_shapes=[pltpu.VMEM((H * S, dh), jnp.float32),       # mix LHS staging
                        pltpu.VMEM((G, B * S, SH), jnp.float32)],   # carrier slabs
        compiler_params=pltpu.CompilerParams(vmem_limit_bytes=32 * 1024 * 1024),
    )(x.reshape(B * S, d), prep["bgin_w"], prep["w1"], prep["w2"],
      prep["last_w"], prep["last_b"], prep["mbig"], prep["biasc"])
    return out2d.reshape(B, S, d)


# ------------------------------ pure-JAX reference ---------------------------

def _ref_multihead_mut(x, M, H):
    B, S, D = x.shape
    dh = D // H
    xh = jnp.transpose(x.reshape(B, S, H, dh), (0, 2, 3, 1))      # [B,H,dh,S]
    yh = jnp.einsum("bhds,hst->bhdt", xh, M, precision="highest")
    return jnp.transpose(yh, (0, 2, 3, 1)).reshape(B, S, D)


def reference_forward(token_ids, params, num_heads):
    xo = bert_embeddings(token_ids, params)
    mm = lambda a, b: jnp.einsum("bsi,ij->bsj", a, b, precision="highest")
    xo = _quad(_ref_multihead_mut(mm(xo, params["bgin_w"]),
                                  params["bgin_M"], num_heads)
               + params["bgin_b"])
    for w1, w2, b, M in zip(params["weight1"], params["weight2"],
                            params["bias"], params["M"]):
        xo = _quad(_ref_multihead_mut(mm(mm(xo, w1), w2), M, num_heads) + b)
    return mm(xo, params["last_w"]) + params["last_b"]


# ----------------------------------- main ------------------------------------

if __name__ == "__main__":
    # Small synthetic BERT config (consistent with the reference module)
    vocab_size = 50
    hidden = 32          # config.hidden_size (d)
    inter = 64           # config.intermediate_size (I)
    num_heads = 4        # config.num_attention_heads
    num_layers = 3       # config.num_hidden_layers -> 2 middle layers
    msl = 8              # sequence_length
    batch = 2

    key = jax.random.PRNGKey(0)
    k_tok, k_we, k_pe, k_te = jax.random.split(key, 4)

    token_ids = jax.random.randint(k_tok, (batch, msl), 0, vocab_size,
                                   dtype=jnp.int32)

    ones = jnp.ones
    params = {
        # BertEmbeddings (deterministic synthetic init)
        "word_emb": 0.02 * jax.random.normal(k_we, (vocab_size, hidden), jnp.float32),
        "pos_emb":  0.02 * jax.random.normal(k_pe, (msl, hidden), jnp.float32),
        "type_emb": 0.02 * jax.random.normal(k_te, (2, hidden), jnp.float32),
        "ln_gamma": ones((hidden,), jnp.float32),
        "ln_beta":  jnp.zeros((hidden,), jnp.float32),
        # flattened-BERT weights; the reference module initializes them to ones
        "bgin_w": ones((hidden, inter), jnp.float32),          # torch.ones((I,d)).T
        "bgin_b": ones((inter,), jnp.float32),
        "bgin_M": ones((num_heads, msl, msl), jnp.float32),
        "weight1": [ones((inter, hidden), jnp.float32) for _ in range(num_layers - 1)],
        "weight2": [ones((hidden, inter), jnp.float32) for _ in range(num_layers - 1)],
        "bias":    [ones((inter,), jnp.float32) for _ in range(num_layers - 1)],
        "M":       [ones((num_heads, msl, msl), jnp.float32) for _ in range(num_layers - 1)],
        "last_w":  ones((inter, hidden), jnp.float32),
        "last_b":  ones((hidden,), jnp.float32),
    }

    # One-time host-side packing (numpy): Mbig / carrier bias / column perms.
    prep, n_mid = prepare_params(params, num_heads, msl)

    fwd = jax.jit(functools.partial(bert_base_flatten_forward,
                                    num_heads=num_heads, num_mid=n_mid))
    out = jax.block_until_ready(fwd(token_ids, params, prep))

    ref = jax.block_until_ready(reference_forward(token_ids, params, num_heads))

    assert out.shape == (batch, msl, hidden), out.shape
    assert np.all(np.isfinite(np.asarray(out)))
    np.testing.assert_allclose(np.asarray(out), np.asarray(ref),
                               rtol=5e-2, atol=1e-3)

    print("KERNEL_OK")
</pallas_src>

<mosaic_0001>
module attributes {stable_mosaic.version = 11 : i64} {
  func.func @_bert_flatten_kernel(%arg0: memref<16x32xf32, #tpu.memory_space<vmem>>, %arg1: memref<32x64xf32, #tpu.memory_space<vmem>>, %arg2: memref<2x64x32xf32, #tpu.memory_space<vmem>>, %arg3: memref<2x32x64xf32, #tpu.memory_space<vmem>>, %arg4: memref<64x32xf32, #tpu.memory_space<vmem>>, %arg5: memref<1x32xf32, #tpu.memory_space<vmem>>, %arg6: memref<3x32x32xf32, #tpu.memory_space<vmem>>, %arg7: memref<3x16x32xf32, #tpu.memory_space<vmem>>, %arg8: memref<16x32xf32, #tpu.memory_space<vmem>>, %arg9: memref<32x16xf32, #tpu.memory_space<vmem>>, %arg10: memref<2x16x32xf32, #tpu.memory_space<vmem>>) attributes {dimension_semantics = [], scalar_prefetch = 0 : i64, scratch_operands = 2 : i64, tpu.core_type = #tpu.core_type<tc>} {
    %c0 = arith.constant 0 : index
    %c0_0 = arith.constant 0 : index
    %0 = vector.load %arg0[%c0, %c0_0] : memref<16x32xf32, #tpu.memory_space<vmem>>, vector<16x32xf32>
    %c0_1 = arith.constant 0 : index
    %c0_2 = arith.constant 0 : index
    %1 = vector.load %arg1[%c0_1, %c0_2] : memref<32x64xf32, #tpu.memory_space<vmem>>, vector<32x64xf32>
    %cst = arith.constant dense<0.000000e+00> : vector<16x64xf32>
    %2 = tpu.matmul %0, %1, %cst {dimension_numbers = #tpu.dot_dimension_numbers<[1], [0], [0], [1], [0, 0, 1, 1], [], []>} : vector<16x32xf32>, vector<32x64xf32>, vector<16x64xf32> -> vector<16x64xf32>
    %c0_3 = arith.constant 0 : index
    %c0_4 = arith.constant 0 : index
    %c0_5 = arith.constant 0 : index
    %3 = vector.load %arg6[%c0_3, %c0_4, %c0_5] : memref<3x32x32xf32, #tpu.memory_space<vmem>>, vector<1x32x32xf32>
    %4 = vector.shape_cast %3 : vector<1x32x32xf32> to vector<32x32xf32>
    %c0_6 = arith.constant 0 : index
    %c0_7 = arith.constant 0 : index
    %c0_8 = arith.constant 0 : index
    %5 = vector.load %arg7[%c0_6, %c0_7, %c0_8] : memref<3x16x32xf32, #tpu.memory_space<vmem>>, vector<1x16x32xf32>
    %6 = vector.shape_cast %5 : vector<1x16x32xf32> to vector<16x32xf32>
    %7 = vector.extract_strided_slice %2 {offsets = [0, 0], sizes = [8, 16], strides = [1, 1]} : vector<16x64xf32> to vector<8x16xf32>
    %c0_9 = arith.constant 0 : index
    %c0_10 = arith.constant 0 : index
    %8 = vector.load %arg9[%c0_9, %c0_10] : memref<32x16xf32, #tpu.memory_space<vmem>>, vector<8x16xf32>
    tpu.vector_store %arg9[%c0_9, %c0_10], %7 {strides = array<i32>} : memref<32x16xf32, #tpu.memory_space<vmem>>, vector<8x16xf32>,
    %9 = vector.extract_strided_slice %2 {offsets = [0, 16], sizes = [8, 16], strides = [1, 1]} : vector<16x64xf32> to vector<8x16xf32>
    %c8 = arith.constant 8 : index
    %c0_11 = arith.constant 0 : index
    %10 = vector.load %arg9[%c8, %c0_11] : memref<32x16xf32, #tpu.memory_space<vmem>>, vector<8x16xf32>
    tpu.vector_store %arg9[%c8, %c0_11], %9 {strides = array<i32>} : memref<32x16xf32, #tpu.memory_space<vmem>>, vector<8x16xf32>,
    %11 = vector.extract_strided_slice %2 {offsets = [0, 32], sizes = [8, 16], strides = [1, 1]} : vector<16x64xf32> to vector<8x16xf32>
    %c16 = arith.constant 16 : index
    %c0_12 = arith.constant 0 : index
    %12 = vector.load %arg9[%c16, %c0_12] : memref<32x16xf32, #tpu.memory_space<vmem>>, vector<8x16xf32>
    tpu.vector_store %arg9[%c16, %c0_12], %11 {strides = array<i32>} : memref<32x16xf32, #tpu.memory_space<vmem>>, vector<8x16xf32>,
    %13 = vector.extract_strided_slice %2 {offsets = [0, 48], sizes = [8, 16], strides = [1, 1]} : vector<16x64xf32> to vector<8x16xf32>
    %c24 = arith.constant 24 : index
    %c0_13 = arith.constant 0 : index
    %14 = vector.load %arg9[%c24, %c0_13] : memref<32x16xf32, #tpu.memory_space<vmem>>, vector<8x16xf32>
    tpu.vector_store %arg9[%c24, %c0_13], %13 {strides = array<i32>} : memref<32x16xf32, #tpu.memory_space<vmem>>, vector<8x16xf32>,
    %c0_14 = arith.constant 0 : index
    %c0_15 = arith.constant 0 : index
    %15 = vector.load %arg9[%c0_14, %c0_15] : memref<32x16xf32, #tpu.memory_space<vmem>>, vector<32x16xf32>
    %16 = tpu.transpose %15, [1, 0] : vector<32x16xf32> -> vector<16x32xf32>
    %cst_16 = arith.constant dense<0.000000e+00> : vector<16x32xf32>
    %17 = tpu.matmul %16, %4, %cst_16 {dimension_numbers = #tpu.dot_dimension_numbers<[1], [0], [0], [1], [0, 0, 1, 1], [], []>} : vector<16x32xf32>, vector<32x32xf32>, vector<16x32xf32> -> vector<16x32xf32>
    %18 = arith.addf %17, %6 : vector<16x32xf32>
    %cst_17 = arith.constant 1.250000e-01 : f32
    %19 = vector.broadcast %cst_17 : f32 to vector<16x32xf32>
    %20 = arith.mulf %19, %18 : vector<16x32xf32>
    %21 = arith.mulf %20, %18 : vector<16x32xf32>
    %cst_18 = arith.constant 2.500000e-01 : f32
    %22 = vector.broadcast %cst_18 : f32 to vector<16x32xf32>
    %23 = arith.mulf %22, %18 : vector<16x32xf32>
    %24 = arith.addf %21, %23 : vector<16x32xf32>
    %cst_19 = arith.constant 5.000000e-01 : f32
    %25 = vector.broadcast %cst_19 : f32 to vector<16x32xf32>
    %26 = arith.addf %24, %25 : vector<16x32xf32>
    %27 = vector.extract_strided_slice %26 {offsets = [0, 0], sizes = [8, 32], strides = [1, 1]} : vector<16x32xf32> to vector<8x32xf32>
    %c0_20 = arith.constant 0 : index
    %c0_21 = arith.constant 0 : index
    %c0_22 = arith.constant 0 : index
    %28 = vector.load %arg10[%c0_20, %c0_21, %c0_22] : memref<2x16x32xf32, #tpu.memory_space<vmem>>, vector<1x8x32xf32>
    %29 = vector.shape_cast %28 : vector<1x8x32xf32> to vector<8x32xf32>
    %30 = vector.shape_cast %27 : vector<8x32xf32> to vector<1x8x32xf32>
    tpu.vector_store %arg10[%c0_20, %c0_21, %c0_22], %30 {strides = array<i32>} : memref<2x16x32xf32, #tpu.memory_space<vmem>>, vector<1x8x32xf32>,
    %31 = vector.extract_strided_slice %26 {offsets = [8, 0], sizes = [8, 32], strides = [1, 1]} : vector<16x32xf32> to vector<8x32xf32>
    %c1 = arith.constant 1 : index
    %c0_23 = arith.constant 0 : index
    %c0_24 = arith.constant 0 : index
    %32 = vector.load %arg10[%c1, %c0_23, %c0_24] : memref<2x16x32xf32, #tpu.memory_space<vmem>>, vector<1x8x32xf32>
    %33 = vector.shape_cast %32 : vector<1x8x32xf32> to vector<8x32xf32>
    %34 = vector.shape_cast %31 : vector<8x32xf32> to vector<1x8x32xf32>
    tpu.vector_store %arg10[%c1, %c0_23, %c0_24], %34 {strides = array<i32>} : memref<2x16x32xf32, #tpu.memory_space<vmem>>, vector<1x8x32xf32>,
    %35 = vector.extract_strided_slice %2 {offsets = [8, 0], sizes = [8, 16], strides = [1, 1]} : vector<16x64xf32> to vector<8x16xf32>
    %c0_25 = arith.constant 0 : index
    %c0_26 = arith.constant 0 : index
    %36 = vector.load %arg9[%c0_25, %c0_26] : memref<32x16xf32, #tpu.memory_space<vmem>>, vector<8x16xf32>
    tpu.vector_store %arg9[%c0_25, %c0_26], %35 {strides = array<i32>} : memref<32x16xf32, #tpu.memory_space<vmem>>, vector<8x16xf32>,
    %37 = vector.extract_strided_slice %2 {offsets = [8, 16], sizes = [8, 16], strides = [1, 1]} : vector<16x64xf32> to vector<8x16xf32>
    %c8_27 = arith.constant 8 : index
    %c0_28 = arith.constant 0 : index
    %38 = vector.load %arg9[%c8_27, %c0_28] : memref<32x16xf32, #tpu.memory_space<vmem>>, vector<8x16xf32>
    tpu.vector_store %arg9[%c8_27, %c0_28], %37 {strides = array<i32>} : memref<32x16xf32, #tpu.memory_space<vmem>>, vector<8x16xf32>,
    %39 = vector.extract_strided_slice %2 {offsets = [8, 32], sizes = [8, 16], strides = [1, 1]} : vector<16x64xf32> to vector<8x16xf32>
    %c16_29 = arith.constant 16 : index
    %c0_30 = arith.constant 0 : index
    %40 = vector.load %arg9[%c16_29, %c0_30] : memref<32x16xf32, #tpu.memory_space<vmem>>, vector<8x16xf32>
    tpu.vector_store %arg9[%c16_29, %c0_30], %39 {strides = array<i32>} : memref<32x16xf32, #tpu.memory_space<vmem>>, vector<8x16xf32>,
    %41 = vector.extract_strided_slice %2 {offsets = [8, 48], sizes = [8, 16], strides = [1, 1]} : vector<16x64xf32> to vector<8x16xf32>
    %c24_31 = arith.constant 24 : index
    %c0_32 = arith.constant 0 : index
    %42 = vector.load %arg9[%c24_31, %c0_32] : memref<32x16xf32, #tpu.memory_space<vmem>>, vector<8x16xf32>
    tpu.vector_store %arg9[%c24_31, %c0_32], %41 {strides = array<i32>} : memref<32x16xf32, #tpu.memory_space<vmem>>, vector<8x16xf32>,
    %c0_33 = arith.constant 0 : index
    %c0_34 = arith.constant 0 : index
    %43 = vector.load %arg9[%c0_33, %c0_34] : memref<32x16xf32, #tpu.memory_space<vmem>>, vector<32x16xf32>
    %44 = tpu.transpose %43, [1, 0] : vector<32x16xf32> -> vector<16x32xf32>
    %cst_35 = arith.constant dense<0.000000e+00> : vector<16x32xf32>
    %45 = tpu.matmul %44, %4, %cst_35 {dimension_numbers = #tpu.dot_dimension_numbers<[1], [0], [0], [1], [0, 0, 1, 1], [], []>} : vector<16x32xf32>, vector<32x32xf32>, vector<16x32xf32> -> vector<16x32xf32>
    %46 = arith.addf %45, %6 : vector<16x32xf32>
    %cst_36 = arith.constant 1.250000e-01 : f32
    %47 = vector.broadcast %cst_36 : f32 to vector<16x32xf32>
    %48 = arith.mulf %47, %46 : vector<16x32xf32>
    %49 = arith.mulf %48, %46 : vector<16x32xf32>
    %cst_37 = arith.constant 2.500000e-01 : f32
    %50 = vector.broadcast %cst_37 : f32 to vector<16x32xf32>
    %51 = arith.mulf %50, %46 : vector<16x32xf32>
    %52 = arith.addf %49, %51 : vector<16x32xf32>
    %cst_38 = arith.constant 5.000000e-01 : f32
    %53 = vector.broadcast %cst_38 : f32 to vector<16x32xf32>
    %54 = arith.addf %52, %53 : vector<16x32xf32>
    %55 = vector.extract_strided_slice %54 {offsets = [0, 0], sizes = [8, 32], strides = [1, 1]} : vector<16x32xf32> to vector<8x32xf32>
    %c0_39 = arith.constant 0 : index
    %c8_40 = arith.constant 8 : index
    %c0_41 = arith.constant 0 : index
    %56 = vector.load %arg10[%c0_39, %c8_40, %c0_41] : memref<2x16x32xf32, #tpu.memory_space<vmem>>, vector<1x8x32xf32>
    %57 = vector.shape_cast %56 : vector<1x8x32xf32> to vector<8x32xf32>
    %58 = vector.shape_cast %55 : vector<8x32xf32> to vector<1x8x32xf32>
    tpu.vector_store %arg10[%c0_39, %c8_40, %c0_41], %58 {strides = array<i32>} : memref<2x16x32xf32, #tpu.memory_space<vmem>>, vector<1x8x32xf32>,
    %59 = vector.extract_strided_slice %54 {offsets = [8, 0], sizes = [8, 32], strides = [1, 1]} : vector<16x32xf32> to vector<8x32xf32>
    %c1_42 = arith.constant 1 : index
    %c8_43 = arith.constant 8 : index
    %c0_44 = arith.constant 0 : index
    %60 = vector.load %arg10[%c1_42, %c8_43, %c0_44] : memref<2x16x32xf32, #tpu.memory_space<vmem>>, vector<1x8x32xf32>
    %61 = vector.shape_cast %60 : vector<1x8x32xf32> to vector<8x32xf32>
    %62 = vector.shape_cast %59 : vector<8x32xf32> to vector<1x8x32xf32>
    tpu.vector_store %arg10[%c1_42, %c8_43, %c0_44], %62 {strides = array<i32>} : memref<2x16x32xf32, #tpu.memory_space<vmem>>, vector<1x8x32xf32>,
    %c0_45 = arith.constant 0 : index
    %c0_46 = arith.constant 0 : index
    %c0_47 = arith.constant 0 : index
    %63 = vector.load %arg2[%c0_45, %c0_46, %c0_47] : memref<2x64x32xf32, #tpu.memory_space<vmem>>, vector<1x64x32xf32>
    %64 = vector.shape_cast %63 : vector<1x64x32xf32> to vector<64x32xf32>
    %c0_48 = arith.constant 0 : index
    %c0_49 = arith.constant 0 : index
    %c0_50 = arith.constant 0 : index
    %65 = vector.load %arg10[%c0_48, %c0_49, %c0_50] : memref<2x16x32xf32, #tpu.memory_space<vmem>>, vector<1x16x32xf32>
    %66 = vector.shape_cast %65 : vector<1x16x32xf32> to vector<16x32xf32>
    %67 = vector.extract_strided_slice %64 {offsets = [0, 0], sizes = [32, 32], strides = [1, 1]} : vector<64x32xf32> to vector<32x32xf32>
    %cst_51 = arith.constant dense<0.000000e+00> : vector<16x32xf32>
    %68 = tpu.matmul %66, %67, %cst_51 {dimension_numbers = #tpu.dot_dimension_numbers<[1], [0], [0], [1], [0, 0, 1, 1], [], []>} : vector<16x32xf32>, vector<32x32xf32>, vector<16x32xf32> -> vector<16x32xf32>
    %c1_52 = arith.constant 1 : index
    %c0_53 = arith.constant 0 : index
    %c0_54 = arith.constant 0 : index
    %69 = vector.load %arg10[%c1_52, %c0_53, %c0_54] : memref<2x16x32xf32, #tpu.memory_space<vmem>>, vector<1x16x32xf32>
    %70 = vector.shape_cast %69 : vector<1x16x32xf32> to vector<16x32xf32>
    %71 = vector.extract_strided_slice %64 {offsets = [32, 0], sizes = [32, 32], strides = [1, 1]} : vector<64x32xf32> to vector<32x32xf32>
    %cst_55 = arith.constant dense<0.000000e+00> : vector<16x32xf32>
    %72 = tpu.matmul %70, %71, %cst_55 {dimension_numbers = #tpu.dot_dimension_numbers<[1], [0], [0], [1], [0, 0, 1, 1], [], []>} : vector<16x32xf32>, vector<32x32xf32>, vector<16x32xf32> -> vector<16x32xf32>
    %73 = arith.addf %68, %72 : vector<16x32xf32>
    %c0_56 = arith.constant 0 : index
    %c0_57 = arith.constant 0 : index
    %c0_58 = arith.constant 0 : index
    %74 = vector.load %arg3[%c0_56, %c0_57, %c0_58] : memref<2x32x64xf32, #tpu.memory_space<vmem>>, vector<1x32x64xf32>
    %75 = vector.shape_cast %74 : vector<1x32x64xf32> to vector<32x64xf32>
    %cst_59 = arith.constant dense<0.000000e+00> : vector<16x64xf32>
    %76 = tpu.matmul %73, %75, %cst_59 {dimension_numbers = #tpu.dot_dimension_numbers<[1], [0], [0], [1], [0, 0, 1, 1], [], []>} : vector<16x32xf32>, vector<32x64xf32>, vector<16x64xf32> -> vector<16x64xf32>
    %c1_60 = arith.constant 1 : index
    %c0_61 = arith.constant 0 : index
    %c0_62 = arith.constant 0 : index
    %77 = vector.load %arg6[%c1_60, %c0_61, %c0_62] : memref<3x32x32xf32, #tpu.memory_space<vmem>>, vector<1x32x32xf32>
    %78 = vector.shape_cast %77 : vector<1x32x32xf32> to vector<32x32xf32>
    %c1_63 = arith.constant 1 : index
    %c0_64 = arith.constant 0 : index
    %c0_65 = arith.constant 0 : index
    %79 = vector.load %arg7[%c1_63, %c0_64, %c0_65] : memref<3x16x32xf32, #tpu.memory_space<vmem>>, vector<1x16x32xf32>
    %80 = vector.shape_cast %79 : vector<1x16x32xf32> to vector<16x32xf32>
    %81 = vector.extract_strided_slice %76 {offsets = [0, 0], sizes = [8, 16], strides = [1, 1]} : vector<16x64xf32> to vector<8x16xf32>
    %c0_66 = arith.constant 0 : index
    %c0_67 = arith.constant 0 : index
    %82 = vector.load %arg9[%c0_66, %c0_67] : memref<32x16xf32, #tpu.memory_space<vmem>>, vector<8x16xf32>
    tpu.vector_store %arg9[%c0_66, %c0_67], %81 {strides = array<i32>} : memref<32x16xf32, #tpu.memory_space<vmem>>, vector<8x16xf32>,
    %83 = vector.extract_strided_slice %76 {offsets = [0, 16], sizes = [8, 16], strides = [1, 1]} : vector<16x64xf32> to vector<8x16xf32>
    %c8_68 = arith.constant 8 : index
    %c0_69 = arith.constant 0 : index
    %84 = vector.load %arg9[%c8_68, %c0_69] : memref<32x16xf32, #tpu.memory_space<vmem>>, vector<8x16xf32>
    tpu.vector_store %arg9[%c8_68, %c0_69], %83 {strides = array<i32>} : memref<32x16xf32, #tpu.memory_space<vmem>>, vector<8x16xf32>,
    %85 = vector.extract_strided_slice %76 {offsets = [0, 32], sizes = [8, 16], strides = [1, 1]} : vector<16x64xf32> to vector<8x16xf32>
    %c16_70 = arith.constant 16 : index
    %c0_71 = arith.constant 0 : index
    %86 = vector.load %arg9[%c16_70, %c0_71] : memref<32x16xf32, #tpu.memory_space<vmem>>, vector<8x16xf32>
    tpu.vector_store %arg9[%c16_70, %c0_71], %85 {strides = array<i32>} : memref<32x16xf32, #tpu.memory_space<vmem>>, vector<8x16xf32>,
    %87 = vector.extract_strided_slice %76 {offsets = [0, 48], sizes = [8, 16], strides = [1, 1]} : vector<16x64xf32> to vector<8x16xf32>
    %c24_72 = arith.constant 24 : index
    %c0_73 = arith.constant 0 : index
    %88 = vector.load %arg9[%c24_72, %c0_73] : memref<32x16xf32, #tpu.memory_space<vmem>>, vector<8x16xf32>
    tpu.vector_store %arg9[%c24_72, %c0_73], %87 {strides = array<i32>} : memref<32x16xf32, #tpu.memory_space<vmem>>, vector<8x16xf32>,
    %c0_74 = arith.constant 0 : index
    %c0_75 = arith.constant 0 : index
    %89 = vector.load %arg9[%c0_74, %c0_75] : memref<32x16xf32, #tpu.memory_space<vmem>>, vector<32x16xf32>
    %90 = tpu.transpose %89, [1, 0] : vector<32x16xf32> -> vector<16x32xf32>
    %cst_76 = arith.constant dense<0.000000e+00> : vector<16x32xf32>
    %91 = tpu.matmul %90, %78, %cst_76 {dimension_numbers = #tpu.dot_dimension_numbers<[1], [0], [0], [1], [0, 0, 1, 1], [], []>} : vector<16x32xf32>, vector<32x32xf32>, vector<16x32xf32> -> vector<16x32xf32>
    %92 = arith.addf %91, %80 : vector<16x32xf32>
    %cst_77 = arith.constant 1.250000e-01 : f32
    %93 = vector.broadcast %cst_77 : f32 to vector<16x32xf32>
    %94 = arith.mulf %93, %92 : vector<16x32xf32>
    %95 = arith.mulf %94, %92 : vector<16x32xf32>
    %cst_78 = arith.constant 2.500000e-01 : f32
    %96 = vector.broadcast %cst_78 : f32 to vector<16x32xf32>
    %97 = arith.mulf %96, %92 : vector<16x32xf32>
    %98 = arith.addf %95, %97 : vector<16x32xf32>
    %cst_79 = arith.constant 5.000000e-01 : f32
    %99 = vector.broadcast %cst_79 : f32 to vector<16x32xf32>
    %100 = arith.addf %98, %99 : vector<16x32xf32>
    %101 = vector.extract_strided_slice %100 {offsets = [0, 0], sizes = [8, 32], strides = [1, 1]} : vector<16x32xf32> to vector<8x32xf32>
    %c0_80 = arith.constant 0 : index
    %c0_81 = arith.constant 0 : index
    %c0_82 = arith.constant 0 : index
    %102 = vector.load %arg10[%c0_80, %c0_81, %c0_82] : memref<2x16x32xf32, #tpu.memory_space<vmem>>, vector<1x8x32xf32>
    %103 = vector.shape_cast %102 : vector<1x8x32xf32> to vector<8x32xf32>
    %104 = vector.shape_cast %101 : vector<8x32xf32> to vector<1x8x32xf32>
    tpu.vector_store %arg10[%c0_80, %c0_81, %c0_82], %104 {strides = array<i32>} : memref<2x16x32xf32, #tpu.memory_space<vmem>>, vector<1x8x32xf32>,
    %105 = vector.extract_strided_slice %100 {offsets = [8, 0], sizes = [8, 32], strides = [1, 1]} : vector<16x32xf32> to vector<8x32xf32>
    %c1_83 = arith.constant 1 : index
    %c0_84 = arith.constant 0 : index
    %c0_85 = arith.constant 0 : index
    %106 = vector.load %arg10[%c1_83, %c0_84, %c0_85] : memref<2x16x32xf32, #tpu.memory_space<vmem>>, vector<1x8x32xf32>
    %107 = vector.shape_cast %106 : vector<1x8x32xf32> to vector<8x32xf32>
    %108 = vector.shape_cast %105 : vector<8x32xf32> to vector<1x8x32xf32>
    tpu.vector_store %arg10[%c1_83, %c0_84, %c0_85], %108 {strides = array<i32>} : memref<2x16x32xf32, #tpu.memory_space<vmem>>, vector<1x8x32xf32>,
    %109 = vector.extract_strided_slice %76 {offsets = [8, 0], sizes = [8, 16], strides = [1, 1]} : vector<16x64xf32> to vector<8x16xf32>
    %c0_86 = arith.constant 0 : index
    %c0_87 = arith.constant 0 : index
    %110 = vector.load %arg9[%c0_86, %c0_87] : memref<32x16xf32, #tpu.memory_space<vmem>>, vector<8x16xf32>
    tpu.vector_store %arg9[%c0_86, %c0_87], %109 {strides = array<i32>} : memref<32x16xf32, #tpu.memory_space<vmem>>, vector<8x16xf32>,
    %111 = vector.extract_strided_slice %76 {offsets = [8, 16], sizes = [8, 16], strides = [1, 1]} : vector<16x64xf32> to vector<8x16xf32>
    %c8_88 = arith.constant 8 : index
    %c0_89 = arith.constant 0 : index
    %112 = vector.load %arg9[%c8_88, %c0_89] : memref<32x16xf32, #tpu.memory_space<vmem>>, vector<8x16xf32>
    tpu.vector_store %arg9[%c8_88, %c0_89], %111 {strides = array<i32>} : memref<32x16xf32, #tpu.memory_space<vmem>>, vector<8x16xf32>,
    %113 = vector.extract_strided_slice %76 {offsets = [8, 32], sizes = [8, 16], strides = [1, 1]} : vector<16x64xf32> to vector<8x16xf32>
    %c16_90 = arith.constant 16 : index
    %c0_91 = arith.constant 0 : index
    %114 = vector.load %arg9[%c16_90, %c0_91] : memref<32x16xf32, #tpu.memory_space<vmem>>, vector<8x16xf32>
    tpu.vector_store %arg9[%c16_90, %c0_91], %113 {strides = array<i32>} : memref<32x16xf32, #tpu.memory_space<vmem>>, vector<8x16xf32>,
    %115 = vector.extract_strided_slice %76 {offsets = [8, 48], sizes = [8, 16], strides = [1, 1]} : vector<16x64xf32> to vector<8x16xf32>
    %c24_92 = arith.constant 24 : index
    %c0_93 = arith.constant 0 : index
    %116 = vector.load %arg9[%c24_92, %c0_93] : memref<32x16xf32, #tpu.memory_space<vmem>>, vector<8x16xf32>
    tpu.vector_store %arg9[%c24_92, %c0_93], %115 {strides = array<i32>} : memref<32x16xf32, #tpu.memory_space<vmem>>, vector<8x16xf32>,
    %c0_94 = arith.constant 0 : index
    %c0_95 = arith.constant 0 : index
    %117 = vector.load %arg9[%c0_94, %c0_95] : memref<32x16xf32, #tpu.memory_space<vmem>>, vector<32x16xf32>
    %118 = tpu.transpose %117, [1, 0] : vector<32x16xf32> -> vector<16x32xf32>
    %cst_96 = arith.constant dense<0.000000e+00> : vector<16x32xf32>
    %119 = tpu.matmul %118, %78, %cst_96 {dimension_numbers = #tpu.dot_dimension_numbers<[1], [0], [0], [1], [0, 0, 1, 1], [], []>} : vector<16x32xf32>, vector<32x32xf32>, vector<16x32xf32> -> vector<16x32xf32>
    %120 = arith.addf %119, %80 : vector<16x32xf32>
    %cst_97 = arith.constant 1.250000e-01 : f32
    %121 = vector.broadcast %cst_97 : f32 to vector<16x32xf32>
    %122 = arith.mulf %121, %120 : vector<16x32xf32>
    %123 = arith.mulf %122, %120 : vector<16x32xf32>
    %cst_98 = arith.constant 2.500000e-01 : f32
    %124 = vector.broadcast %cst_98 : f32 to vector<16x32xf32>
    %125 = arith.mulf %124, %120 : vector<16x32xf32>
    %126 = arith.addf %123, %125 : vector<16x32xf32>
    %cst_99 = arith.constant 5.000000e-01 : f32
    %127 = vector.broadcast %cst_99 : f32 to vector<16x32xf32>
    %128 = arith.addf %126, %127 : vector<16x32xf32>
    %129 = vector.extract_strided_slice %128 {offsets = [0, 0], sizes = [8, 32], strides = [1, 1]} : vector<16x32xf32> to vector<8x32xf32>
    %c0_100 = arith.constant 0 : index
    %c8_101 = arith.constant 8 : index
    %c0_102 = arith.constant 0 : index
    %130 = vector.load %arg10[%c0_100, %c8_101, %c0_102] : memref<2x16x32xf32, #tpu.memory_space<vmem>>, vector<1x8x32xf32>
    %131 = vector.shape_cast %130 : vector<1x8x32xf32> to vector<8x32xf32>
    %132 = vector.shape_cast %129 : vector<8x32xf32> to vector<1x8x32xf32>
    tpu.vector_store %arg10[%c0_100, %c8_101, %c0_102], %132 {strides = array<i32>} : memref<2x16x32xf32, #tpu.memory_space<vmem>>, vector<1x8x32xf32>,
    %133 = vector.extract_strided_slice %128 {offsets = [8, 0], sizes = [8, 32], strides = [1, 1]} : vector<16x32xf32> to vector<8x32xf32>
    %c1_103 = arith.constant 1 : index
    %c8_104 = arith.constant 8 : index
    %c0_105 = arith.constant 0 : index
    %134 = vector.load %arg10[%c1_103, %c8_104, %c0_105] : memref<2x16x32xf32, #tpu.memory_space<vmem>>, vector<1x8x32xf32>
    %135 = vector.shape_cast %134 : vector<1x8x32xf32> to vector<8x32xf32>
    %136 = vector.shape_cast %133 : vector<8x32xf32> to vector<1x8x32xf32>
    tpu.vector_store %arg10[%c1_103, %c8_104, %c0_105], %136 {strides = array<i32>} : memref<2x16x32xf32, #tpu.memory_space<vmem>>, vector<1x8x32xf32>,
    %c1_106 = arith.constant 1 : index
    %c0_107 = arith.constant 0 : index
    %c0_108 = arith.constant 0 : index
    %137 = vector.load %arg2[%c1_106, %c0_107, %c0_108] : memref<2x64x32xf32, #tpu.memory_space<vmem>>, vector<1x64x32xf32>
    %138 = vector.shape_cast %137 : vector<1x64x32xf32> to vector<64x32xf32>
    %c0_109 = arith.constant 0 : index
    %c0_110 = arith.constant 0 : index
    %c0_111 = arith.constant 0 : index
    %139 = vector.load %arg10[%c0_109, %c0_110, %c0_111] : memref<2x16x32xf32, #tpu.memory_space<vmem>>, vector<1x16x32xf32>
    %140 = vector.shape_cast %139 : vector<1x16x32xf32> to vector<16x32xf32>
    %141 = vector.extract_strided_slice %138 {offsets = [0, 0], sizes = [32, 32], strides = [1, 1]} : vector<64x32xf32> to vector<32x32xf32>
    %cst_112 = arith.constant dense<0.000000e+00> : vector<16x32xf32>
    %142 = tpu.matmul %140, %141, %cst_112 {dimension_numbers = #tpu.dot_dimension_numbers<[1], [0], [0], [1], [0, 0, 1, 1], [], []>} : vector<16x32xf32>, vector<32x32xf32>, vector<16x32xf32> -> vector<16x32xf32>
    %c1_113 = arith.constant 1 : index
    %c0_114 = arith.constant 0 : index
    %c0_115 = arith.constant 0 : index
    %143 = vector.load %arg10[%c1_113, %c0_114, %c0_115] : memref<2x16x32xf32, #tpu.memory_space<vmem>>, vector<1x16x32xf32>
    %144 = vector.shape_cast %143 : vector<1x16x32xf32> to vector<16x32xf32>
    %145 = vector.extract_strided_slice %138 {offsets = [32, 0], sizes = [32, 32], strides = [1, 1]} : vector<64x32xf32> to vector<32x32xf32>
    %cst_116 = arith.constant dense<0.000000e+00> : vector<16x32xf32>
    %146 = tpu.matmul %144, %145, %cst_116 {dimension_numbers = #tpu.dot_dimension_numbers<[1], [0], [0], [1], [0, 0, 1, 1], [], []>} : vector<16x32xf32>, vector<32x32xf32>, vector<16x32xf32> -> vector<16x32xf32>
    %147 = arith.addf %142, %146 : vector<16x32xf32>
    %c1_117 = arith.constant 1 : index
    %c0_118 = arith.constant 0 : index
    %c0_119 = arith.constant 0 : index
    %148 = vector.load %arg3[%c1_117, %c0_118, %c0_119] : memref<2x32x64xf32, #tpu.memory_space<vmem>>, vector<1x32x64xf32>
    %149 = vector.shape_cast %148 : vector<1x32x64xf32> to vector<32x64xf32>
    %cst_120 = arith.constant dense<0.000000e+00> : vector<16x64xf32>
    %150 = tpu.matmul %147, %149, %cst_120 {dimension_numbers = #tpu.dot_dimension_numbers<[1], [0], [0], [1], [0, 0, 1, 1], [], []>} : vector<16x32xf32>, vector<32x64xf32>, vector<16x64xf32> -> vector<16x64xf32>
    %c2 = arith.constant 2 : index
    %c0_121 = arith.constant 0 : index
    %c0_122 = arith.constant 0 : index
    %151 = vector.load %arg6[%c2, %c0_121, %c0_122] : memref<3x32x32xf32, #tpu.memory_space<vmem>>, vector<1x32x32xf32>
    %152 = vector.shape_cast %151 : vector<1x32x32xf32> to vector<32x32xf32>
    %c2_123 = arith.constant 2 : index
    %c0_124 = arith.constant 0 : index
    %c0_125 = arith.constant 0 : index
    %153 = vector.load %arg7[%c2_123, %c0_124, %c0_125] : memref<3x16x32xf32, #tpu.memory_space<vmem>>, vector<1x16x32xf32>
    %154 = vector.shape_cast %153 : vector<1x16x32xf32> to vector<16x32xf32>
    %155 = vector.extract_strided_slice %150 {offsets = [0, 0], sizes = [8, 16], strides = [1, 1]} : vector<16x64xf32> to vector<8x16xf32>
    %c0_126 = arith.constant 0 : index
    %c0_127 = arith.constant 0 : index
    %156 = vector.load %arg9[%c0_126, %c0_127] : memref<32x16xf32, #tpu.memory_space<vmem>>, vector<8x16xf32>
    tpu.vector_store %arg9[%c0_126, %c0_127], %155 {strides = array<i32>} : memref<32x16xf32, #tpu.memory_space<vmem>>, vector<8x16xf32>,
    %157 = vector.extract_strided_slice %150 {offsets = [0, 16], sizes = [8, 16], strides = [1, 1]} : vector<16x64xf32> to vector<8x16xf32>
    %c8_128 = arith.constant 8 : index
    %c0_129 = arith.constant 0 : index
    %158 = vector.load %arg9[%c8_128, %c0_129] : memref<32x16xf32, #tpu.memory_space<vmem>>, vector<8x16xf32>
    tpu.vector_store %arg9[%c8_128, %c0_129], %157 {strides = array<i32>} : memref<32x16xf32, #tpu.memory_space<vmem>>, vector<8x16xf32>,
    %159 = vector.extract_strided_slice %150 {offsets = [0, 32], sizes = [8, 16], strides = [1, 1]} : vector<16x64xf32> to vector<8x16xf32>
    %c16_130 = arith.constant 16 : index
    %c0_131 = arith.constant 0 : index
    %160 = vector.load %arg9[%c16_130, %c0_131] : memref<32x16xf32, #tpu.memory_space<vmem>>, vector<8x16xf32>
    tpu.vector_store %arg9[%c16_130, %c0_131], %159 {strides = array<i32>} : memref<32x16xf32, #tpu.memory_space<vmem>>, vector<8x16xf32>,
    %161 = vector.extract_strided_slice %150 {offsets = [0, 48], sizes = [8, 16], strides = [1, 1]} : vector<16x64xf32> to vector<8x16xf32>
    %c24_132 = arith.constant 24 : index
    %c0_133 = arith.constant 0 : index
    %162 = vector.load %arg9[%c24_132, %c0_133] : memref<32x16xf32, #tpu.memory_space<vmem>>, vector<8x16xf32>
    tpu.vector_store %arg9[%c24_132, %c0_133], %161 {strides = array<i32>} : memref<32x16xf32, #tpu.memory_space<vmem>>, vector<8x16xf32>,
    %c0_134 = arith.constant 0 : index
    %c0_135 = arith.constant 0 : index
    %163 = vector.load %arg9[%c0_134, %c0_135] : memref<32x16xf32, #tpu.memory_space<vmem>>, vector<32x16xf32>
    %164 = tpu.transpose %163, [1, 0] : vector<32x16xf32> -> vector<16x32xf32>
    %cst_136 = arith.constant dense<0.000000e+00> : vector<16x32xf32>
    %165 = tpu.matmul %164, %152, %cst_136 {dimension_numbers = #tpu.dot_dimension_numbers<[1], [0], [0], [1], [0, 0, 1, 1], [], []>} : vector<16x32xf32>, vector<32x32xf32>, vector<16x32xf32> -> vector<16x32xf32>
    %166 = arith.addf %165, %154 : vector<16x32xf32>
    %cst_137 = arith.constant 1.250000e-01 : f32
    %167 = vector.broadcast %cst_137 : f32 to vector<16x32xf32>
    %168 = arith.mulf %167, %166 : vector<16x32xf32>
    %169 = arith.mulf %168, %166 : vector<16x32xf32>
    %cst_138 = arith.constant 2.500000e-01 : f32
    %170 = vector.broadcast %cst_138 : f32 to vector<16x32xf32>
    %171 = arith.mulf %170, %166 : vector<16x32xf32>
    %172 = arith.addf %169, %171 : vector<16x32xf32>
    %cst_139 = arith.constant 5.000000e-01 : f32
    %173 = vector.broadcast %cst_139 : f32 to vector<16x32xf32>
    %174 = arith.addf %172, %173 : vector<16x32xf32>
    %175 = vector.extract_strided_slice %174 {offsets = [0, 0], sizes = [8, 32], strides = [1, 1]} : vector<16x32xf32> to vector<8x32xf32>
    %c0_140 = arith.constant 0 : index
    %c0_141 = arith.constant 0 : index
    %c0_142 = arith.constant 0 : index
    %176 = vector.load %arg10[%c0_140, %c0_141, %c0_142] : memref<2x16x32xf32, #tpu.memory_space<vmem>>, vector<1x8x32xf32>
    %177 = vector.shape_cast %176 : vector<1x8x32xf32> to vector<8x32xf32>
    %178 = vector.shape_cast %175 : vector<8x32xf32> to vector<1x8x32xf32>
    tpu.vector_store %arg10[%c0_140, %c0_141, %c0_142], %178 {strides = array<i32>} : memref<2x16x32xf32, #tpu.memory_space<vmem>>, vector<1x8x32xf32>,
    %179 = vector.extract_strided_slice %174 {offsets = [8, 0], sizes = [8, 32], strides = [1, 1]} : vector<16x32xf32> to vector<8x32xf32>
    %c1_143 = arith.constant 1 : index
    %c0_144 = arith.constant 0 : index
    %c0_145 = arith.constant 0 : index
    %180 = vector.load %arg10[%c1_143, %c0_144, %c0_145] : memref<2x16x32xf32, #tpu.memory_space<vmem>>, vector<1x8x32xf32>
    %181 = vector.shape_cast %180 : vector<1x8x32xf32> to vector<8x32xf32>
    %182 = vector.shape_cast %179 : vector<8x32xf32> to vector<1x8x32xf32>
    tpu.vector_store %arg10[%c1_143, %c0_144, %c0_145], %182 {strides = array<i32>} : memref<2x16x32xf32, #tpu.memory_space<vmem>>, vector<1x8x32xf32>,
    %183 = vector.extract_strided_slice %150 {offsets = [8, 0], sizes = [8, 16], strides = [1, 1]} : vector<16x64xf32> to vector<8x16xf32>
    %c0_146 = arith.constant 0 : index
    %c0_147 = arith.constant 0 : index
    %184 = vector.load %arg9[%c0_146, %c0_147] : memref<32x16xf32, #tpu.memory_space<vmem>>, vector<8x16xf32>
    tpu.vector_store %arg9[%c0_146, %c0_147], %183 {strides = array<i32>} : memref<32x16xf32, #tpu.memory_space<vmem>>, vector<8x16xf32>,
    %185 = vector.extract_strided_slice %150 {offsets = [8, 16], sizes = [8, 16], strides = [1, 1]} : vector<16x64xf32> to vector<8x16xf32>
    %c8_148 = arith.constant 8 : index
    %c0_149 = arith.constant 0 : index
    %186 = vector.load %arg9[%c8_148, %c0_149] : memref<32x16xf32, #tpu.memory_space<vmem>>, vector<8x16xf32>
    tpu.vector_store %arg9[%c8_148, %c0_149], %185 {strides = array<i32>} : memref<32x16xf32, #tpu.memory_space<vmem>>, vector<8x16xf32>,
    %187 = vector.extract_strided_slice %150 {offsets = [8, 32], sizes = [8, 16], strides = [1, 1]} : vector<16x64xf32> to vector<8x16xf32>
    %c16_150 = arith.constant 16 : index
    %c0_151 = arith.constant 0 : index
    %188 = vector.load %arg9[%c16_150, %c0_151] : memref<32x16xf32, #tpu.memory_space<vmem>>, vector<8x16xf32>
    tpu.vector_store %arg9[%c16_150, %c0_151], %187 {strides = array<i32>} : memref<32x16xf32, #tpu.memory_space<vmem>>, vector<8x16xf32>,
    %189 = vector.extract_strided_slice %150 {offsets = [8, 48], sizes = [8, 16], strides = [1, 1]} : vector<16x64xf32> to vector<8x16xf32>
    %c24_152 = arith.constant 24 : index
    %c0_153 = arith.constant 0 : index
    %190 = vector.load %arg9[%c24_152, %c0_153] : memref<32x16xf32, #tpu.memory_space<vmem>>, vector<8x16xf32>
    tpu.vector_store %arg9[%c24_152, %c0_153], %189 {strides = array<i32>} : memref<32x16xf32, #tpu.memory_space<vmem>>, vector<8x16xf32>,
    %c0_154 = arith.constant 0 : index
    %c0_155 = arith.constant 0 : index
    %191 = vector.load %arg9[%c0_154, %c0_155] : memref<32x16xf32, #tpu.memory_space<vmem>>, vector<32x16xf32>
    %192 = tpu.transpose %191, [1, 0] : vector<32x16xf32> -> vector<16x32xf32>
    %cst_156 = arith.constant dense<0.000000e+00> : vector<16x32xf32>
    %193 = tpu.matmul %192, %152, %cst_156 {dimension_numbers = #tpu.dot_dimension_numbers<[1], [0], [0], [1], [0, 0, 1, 1], [], []>} : vector<16x32xf32>, vector<32x32xf32>, vector<16x32xf32> -> vector<16x32xf32>
    %194 = arith.addf %193, %154 : vector<16x32xf32>
    %cst_157 = arith.constant 1.250000e-01 : f32
    %195 = vector.broadcast %cst_157 : f32 to vector<16x32xf32>
    %196 = arith.mulf %195, %194 : vector<16x32xf32>
    %197 = arith.mulf %196, %194 : vector<16x32xf32>
    %cst_158 = arith.constant 2.500000e-01 : f32
    %198 = vector.broadcast %cst_158 : f32 to vector<16x32xf32>
    %199 = arith.mulf %198, %194 : vector<16x32xf32>
    %200 = arith.addf %197, %199 : vector<16x32xf32>
    %cst_159 = arith.constant 5.000000e-01 : f32
    %201 = vector.broadcast %cst_159 : f32 to vector<16x32xf32>
    %202 = arith.addf %200, %201 : vector<16x32xf32>
    %203 = vector.extract_strided_slice %202 {offsets = [0, 0], sizes = [8, 32], strides = [1, 1]} : vector<16x32xf32> to vector<8x32xf32>
    %c0_160 = arith.constant 0 : index
    %c8_161 = arith.constant 8 : index
    %c0_162 = arith.constant 0 : index
    %204 = vector.load %arg10[%c0_160, %c8_161, %c0_162] : memref<2x16x32xf32, #tpu.memory_space<vmem>>, vector<1x8x32xf32>
    %205 = vector.shape_cast %204 : vector<1x8x32xf32> to vector<8x32xf32>
    %206 = vector.shape_cast %203 : vector<8x32xf32> to vector<1x8x32xf32>
    tpu.vector_store %arg10[%c0_160, %c8_161, %c0_162], %206 {strides = array<i32>} : memref<2x16x32xf32, #tpu.memory_space<vmem>>, vector<1x8x32xf32>,
    %207 = vector.extract_strided_slice %202 {offsets = [8, 0], sizes = [8, 32], strides = [1, 1]} : vector<16x32xf32> to vector<8x32xf32>
    %c1_163 = arith.constant 1 : index
    %c8_164 = arith.constant 8 : index
    %c0_165 = arith.constant 0 : index
    %208 = vector.load %arg10[%c1_163, %c8_164, %c0_165] : memref<2x16x32xf32, #tpu.memory_space<vmem>>, vector<1x8x32xf32>
    %209 = vector.shape_cast %208 : vector<1x8x32xf32> to vector<8x32xf32>
    %210 = vector.shape_cast %207 : vector<8x32xf32> to vector<1x8x32xf32>
    tpu.vector_store %arg10[%c1_163, %c8_164, %c0_165], %210 {strides = array<i32>} : memref<2x16x32xf32, #tpu.memory_space<vmem>>, vector<1x8x32xf32>,
    %c0_166 = arith.constant 0 : index
    %c0_167 = arith.constant 0 : index
    %211 = vector.load %arg4[%c0_166, %c0_167] : memref<64x32xf32, #tpu.memory_space<vmem>>, vector<64x32xf32>
    %c0_168 = arith.constant 0 : index
    %c0_169 = arith.constant 0 : index
    %c0_170 = arith.constant 0 : index
    %212 = vector.load %arg10[%c0_168, %c0_169, %c0_170] : memref<2x16x32xf32, #tpu.memory_space<vmem>>, vector<1x16x32xf32>
    %213 = vector.shape_cast %212 : vector<1x16x32xf32> to vector<16x32xf32>
    %214 = vector.extract_strided_slice %211 {offsets = [0, 0], sizes = [32, 32], strides = [1, 1]} : vector<64x32xf32> to vector<32x32xf32>
    %cst_171 = arith.constant dense<0.000000e+00> : vector<16x32xf32>
    %215 = tpu.matmul %213, %214, %cst_171 {dimension_numbers = #tpu.dot_dimension_numbers<[1], [0], [0], [1], [0, 0, 1, 1], [], []>} : vector<16x32xf32>, vector<32x32xf32>, vector<16x32xf32> -> vector<16x32xf32>
    %c1_172 = arith.constant 1 : index
    %c0_173 = arith.constant 0 : index
    %c0_174 = arith.constant 0 : index
    %216 = vector.load %arg10[%c1_172, %c0_173, %c0_174] : memref<2x16x32xf32, #tpu.memory_space<vmem>>, vector<1x16x32xf32>
    %217 = vector.shape_cast %216 : vector<1x16x32xf32> to vector<16x32xf32>
    %218 = vector.extract_strided_slice %211 {offsets = [32, 0], sizes = [32, 32], strides = [1, 1]} : vector<64x32xf32> to vector<32x32xf32>
    %cst_175 = arith.constant dense<0.000000e+00> : vector<16x32xf32>
    %219 = tpu.matmul %217, %218, %cst_175 {dimension_numbers = #tpu.dot_dimension_numbers<[1], [0], [0], [1], [0, 0, 1, 1], [], []>} : vector<16x32xf32>, vector<32x32xf32>, vector<16x32xf32> -> vector<16x32xf32>
    %220 = arith.addf %215, %219 : vector<16x32xf32>
    %c0_176 = arith.constant 0 : index
    %c0_177 = arith.constant 0 : index
    %221 = vector.load %arg5[%c0_176, %c0_177] : memref<1x32xf32, #tpu.memory_space<vmem>>, vector<1x32xf32>
    %222 = vector.broadcast %221 : vector<1x32xf32> to vector<16x32xf32>
    %223 = arith.addf %220, %222 : vector<16x32xf32>
    %c0_178 = arith.constant 0 : index
    %c0_179 = arith.constant 0 : index
    %224 = vector.load %arg8[%c0_178, %c0_179] : memref<16x32xf32, #tpu.memory_space<vmem>>, vector<16x32xf32>
    tpu.vector_store %arg8[%c0_178, %c0_179], %223 {strides = array<i32>} : memref<16x32xf32, #tpu.memory_space<vmem>>, vector<16x32xf32>,
    return
  }
}

</mosaic_0001>

<llo_original>
// kernel: bert_base_flatten_forward.1
$region0: #{bert_base_flatten_forward.1}
  #allocation0 [shape = 'u32[]', space=smem, size = 0x4, offset = 0x4, fixed_abs, tag = 'smem constant byte address 0x4 - core index']
  #allocation1 [shape = 'u32[144,128]{1,0:T(1,128)}', space=vmem, size = 0x12000, scoped, tag = 'internal scratch']
  #allocation2 [shape = 'f32[32,16]{1,0:T(8,128)}', space=vmem, size = 0x4000, scoped, tag = 'scratch operand']
  #allocation3 [shape = 'f32[2,16,32]{2,1,0:T(8,128)}', space=vmem, size = 0x4000, scoped, tag = 'scratch operand']
  %s0 = inlined_call_operand.vmem [shape: f32[16,32], index: 0, kind: input, shape index: {}]
  %s1 = inlined_call_operand.vmem [shape: f32[32,64], index: 1, kind: input, shape index: {}]
  %s2 = inlined_call_operand.vmem [shape: f32[2,64,32], index: 2, kind: input, shape index: {}]
  %s3 = inlined_call_operand.vmem [shape: f32[2,32,64], index: 3, kind: input, shape index: {}]
  %s4 = inlined_call_operand.vmem [shape: f32[64,32], index: 4, kind: input, shape index: {}]
  %s5 = inlined_call_operand.vmem [shape: f32[1,32], index: 5, kind: input, shape index: {}]
  %s6 = inlined_call_operand.vmem [shape: f32[3,32,32], index: 6, kind: input, shape index: {}]
  %s7 = inlined_call_operand.vmem [shape: f32[3,16,32], index: 7, kind: input, shape index: {}]
  %s8 = inlined_call_operand.hbm [shape: f32[16,32], index: 8, kind: output, shape index: {}]
  %s9 = sld [smem:[#allocation0]]
  $region42: #{bert_base_flatten_forward.1} parent=0
    _
  %s11 = ssub.s32 1, %s9
  %s12 = scalar_select 0, %s11, %s9
  $region1: #{bert_base_flatten_forward.1} parent=0
    #allocation4 [shape = 'u8[8192]{0}', space=vmem, size = 0x2000, scoped, tag = 'output window, operand 0, single buffered']
    #allocation5 [shape = 's32[1]{0}', space=sflag, size = 0x4, scoped, tag = 'scoped memory for bert_base_flatten_forward.1']
    %13 = vsyncpa [#allocation5], 0
    // Predicated region
    $region2: #{bert_base_flatten_forward.1} parent=1 // pred_check
      _
    $region3: #{bert_base_flatten_forward.1} parent=1 // pred_check_branch
      %15 = sbr.rel (0) target = $region5
    $region4: #{bert_base_flatten_forward.1} parent=1 // pred_region
      _
    $region5: #{bert_base_flatten_forward.1} parent=1 // pred_fallthru
      _
    // Predicated region
    $region6: #{bert_base_flatten_forward.1} parent=1 // pred_check
      _
    $region7: #{bert_base_flatten_forward.1} parent=1 // pred_check_branch
      %17 = sbr.rel (0) target = $region9
    $region8: #{bert_base_flatten_forward.1} parent=1 // pred_region
      _
    $region9: #{bert_base_flatten_forward.1} parent=1 // pred_fallthru
      _
    // Predicated region
    $region10: #{bert_base_flatten_forward.1} parent=1 // pred_check
      _
    $region11: #{bert_base_flatten_forward.1} parent=1 // pred_check_branch
      %19 = sbr.rel (0) target = $region13
    $region12: #{bert_base_flatten_forward.1} parent=1 // pred_region
      _
    $region13: #{bert_base_flatten_forward.1} parent=1 // pred_fallthru
      _
    // Predicated region
    $region14: #{bert_base_flatten_forward.1} parent=1 // pred_check
      _
    $region15: #{bert_base_flatten_forward.1} parent=1 // pred_check_branch
      %21 = sbr.rel (0) target = $region17
    $region16: #{bert_base_flatten_forward.1} parent=1 // pred_region
      _
    $region17: #{bert_base_flatten_forward.1} parent=1 // pred_fallthru
      _
    // Predicated region
    $region18: #{bert_base_flatten_forward.1} parent=1 // pred_check
      _
    $region19: #{bert_base_flatten_forward.1} parent=1 // pred_check_branch
      %23 = sbr.rel (0) target = $region21
    $region20: #{bert_base_flatten_forward.1} parent=1 // pred_region
      _
    $region21: #{bert_base_flatten_forward.1} parent=1 // pred_fallthru
      _
    // Predicated region
    $region22: #{bert_base_flatten_forward.1} parent=1 // pred_check
      _
    $region23: #{bert_base_flatten_forward.1} parent=1 // pred_check_branch
      %25 = sbr.rel (0) target = $region25
    $region24: #{bert_base_flatten_forward.1} parent=1 // pred_region
      _
    $region25: #{bert_base_flatten_forward.1} parent=1 // pred_fallthru
      _
    // Predicated region
    $region26: #{bert_base_flatten_forward.1} parent=1 // pred_check
      _
    $region27: #{bert_base_flatten_forward.1} parent=1 // pred_check_branch
      %27 = sbr.rel (0) target = $region29
    $region28: #{bert_base_flatten_forward.1} parent=1 // pred_region
      _
    $region29: #{bert_base_flatten_forward.1} parent=1 // pred_fallthru
      _
    // Predicated region
    $region30: #{bert_base_flatten_forward.1} parent=1 // pred_check
      _
    $region31: #{bert_base_flatten_forward.1} parent=1 // pred_check_branch
      %29 = sbr.rel (0) target = $region33
    $region32: #{bert_base_flatten_forward.1} parent=1 // pred_region
      _
    $region33: #{bert_base_flatten_forward.1} parent=1 // pred_fallthru
      _
    %v30 = vld [vmem:[%s0] sm:$0xff]
    %v31 = vld [vmem:[%s0 + $0x8] sm:$0xff]
    %v32 = vld [vmem:[%s1] sm:$0xff]
    %v33 = vld [vmem:[%s1 + $0x8] sm:$0xff]
    %v34 = vld [vmem:[%s1 + $0x10] sm:$0xff]
    %v35 = vld [vmem:[%s1 + $0x18] sm:$0xff]
    %vm36 = vcmask 261120
    %v38 = vsel %vm36, %v30, 0
    %v41 = vsel %vm36, %v31, 0
    %43 = vmatprep.subr.mxu0 0.0
    %44 = vmatpush1.msra.mxu0 %v32
    %45 = vmatprep.subr.mxu0 0.0
    %46 = vmatpush1.msra.mxu0 %v33
    %47 = vmatprep.subr.mxu0 0.0
    %48 = vmatpush1.msra.mxu0 %v34
    %49 = vmatprep.subr.mxu0 0.0
    %50 = vmatpush1.msra.mxu0 %v35
    %51 = vmatprep.subr.mxu0 0.0
    %52 = vmatpush1.msra.mxu0 0.0
    %53 = vmatprep.subr.mxu0 0.0
    %54 = vmatpush1.msra.mxu0 0.0
    %55 = vmatprep.subr.mxu0 0.0
    %56 = vmatpush1.msra.mxu0 0.0
    %57 = vmatprep.subr.mxu0 0.0
    %58 = vmatpush1.msra.mxu0 0.0
    %59 = vmatprep.subr.mxu0 0.0
    %60 = vmatpush1.msra.mxu0 0.0
    %61 = vmatprep.subr.mxu0 0.0
    %62 = vmatpush1.msra.mxu0 0.0
    %63 = vmatprep.subr.mxu0 0.0
    %64 = vmatpush1.msra.mxu0 0.0
    %65 = vmatprep.subr.mxu0 0.0
    %66 = vmatpush1.msra.mxu0 0.0
    %67 = vmatprep.subr.mxu0 0.0
    %68 = vmatpush1.msra.mxu0 0.0
    %69 = vmatprep.subr.mxu0 0.0
    %70 = vmatpush1.msra.mxu0 0.0
    %71 = vmatprep.subr.mxu0 0.0
    %72 = vmatpush1.msra.mxu0 0.0
    %73 = vmatprep.subr.mxu0 0.0
    %74 = vmatpush1.msra.mxu0 0.0
    %75 = vmatprep.subr.mxu0 0.0
    %76 = vmatpush1.msra.mxu0 0.0
    %77 = vmatprep.subr.mxu0 0.0
    %78 = vmatpush1.msra.mxu0 0.0
    %79 = vmatprep.subr.mxu0 0.0
    %80 = vmatpush1.msra.mxu0 0.0
    %81 = vmatprep.subr.mxu0 0.0
    %82 = vmatpush1.msra.mxu0 0.0
    %83 = vmatprep.subr.mxu0 0.0
    %84 = vmatpush1.msra.mxu0 0.0
    %85 = vmatprep.subr.mxu0 0.0
    %86 = vmatpush1.msra.mxu0 0.0
    %87 = vmatprep.subr.mxu0 0.0
    %88 = vmatpush1.msra.mxu0 0.0
    %89 = vmatprep.subr.mxu0 0.0
    %90 = vmatpush1.msra.mxu0 0.0
    %91 = vmatprep.subr.mxu0 0.0
    %92 = vmatpush1.msra.mxu0 0.0
    %93 = vmatprep.subr.mxu0 0.0
    %94 = vmatpush1.msra.mxu0 0.0
    %95 = vmatprep.subr.mxu0 0.0
    %96 = vmatpush1.msra.mxu0 0.0
    %97 = vmatprep.subr.mxu0 0.0
    %98 = vmatpush1.msra.mxu0 0.0
    %99 = vmatprep.subr.mxu0 0.0
    %100 = vmatpush1.msra.mxu0 0.0
    %101 = vmatprep.subr.mxu0 0.0
    %102 = vmatpush1.msra.mxu0 0.0
    %103 = vmatprep.subr.mxu0 0.0
    %104 = vmatpush1.msra.mxu0 0.0
    %105 = vmatprep.subr.mxu0 0.0
    %106 = vmatpush1.msra.mxu0 0.0
    %107 = vmatprep.mubr.f32.mxu0 0.0
    %108 = vmatmul.mubr.f32.gmra.mrb[0].mxu0 %v38
    %v109 = vpop.f32.mrb[0].mxu0
    %v110 = vadd.f32 0.0, %v109
    %v111 = vpop.f32.mrb[0].mxu0
    %112 = vmatprep.mubr.f32.mxu0 0.0
    %113 = vmatmul.mubr.f32.gmra.mrb[0].mxu0 %v41
    %v114 = vpop.f32.mrb[0].mxu0
    %v115 = vadd.f32 0.0, %v114
    %v116 = vpop.f32.mrb[0].mxu0
    %117 = vdwg.mxu0
    %v118 = vld [vmem:[%s6] sm:$0xff]
    %v119 = vld [vmem:[%s6 + $0x8] sm:$0xff]
    %v120 = vld [vmem:[%s6 + $0x10] sm:$0xff]
    %v121 = vld [vmem:[%s6 + $0x18] sm:$0xff]
    %v122 = vld [vmem:[%s7] sm:$0xff]
    %v123 = vld [vmem:[%s7 + $0x8] sm:$0xff]
    %vm124 = vcmask 130048
    %125 = vst.msk [vmem:[#allocation2] sm:$0xff] %vm124, %v110
    %127 = vrot.lane.b32.xlu0 %v110, 112
    %v128 = vpop.permute.xlu0 %127
    %130 = vst.msk [vmem:[#allocation2 + $0x8] sm:$0xff] %vm124, %v128
    %131 = vrot.lane.b32.xlu0 %v110, 96
    %v132 = vpop.permute.xlu0 %131
    %134 = vst.msk [vmem:[#allocation2 + $0x10] sm:$0xff] %vm124, %v132
    %135 = vrot.lane.b32.xlu0 %v110, 80
    %v136 = vpop.permute.xlu0 %135
    %138 = vst.msk [vmem:[#allocation2 + $0x18] sm:$0xff] %vm124, %v136
    %v139 = vld [vmem:[#allocation2] sm:$0xff]
    %v140 = vld [vmem:[#allocation2 + $0x8] sm:$0xff]
    %v141 = vld [vmem:[#allocation2 + $0x10] sm:$0xff]
    %v142 = vld [vmem:[#allocation2 + $0x18] sm:$0xff]
    %143 = vxpose.xlu0.b32.start [1/16] %v139, 128
    %144 = vxpose.xlu0.b32.cont [2/16] %v140, 128
    %145 = vxpose.xlu0.b32.cont [3/16] %v141, 128
    %146 = vxpose.xlu0.b32.cont [4/16] %v142, 128
    %147 = vxpose.xlu0.b32.cont [5/16] 0.0, 128
    %148 = vxpose.xlu0.b32.cont [6/16] 0.0, 128
    %149 = vxpose.xlu0.b32.cont [7/16] 0.0, 128
    %150 = vxpose.xlu0.b32.cont [8/16] 0.0, 128
    %151 = vxpose.xlu0.b32.cont [9/16] 0.0, 128
    %152 = vxpose.xlu0.b32.cont [10/16] 0.0, 128
    %153 = vxpose.xlu0.b32.cont [11/16] 0.0, 128
    %154 = vxpose.xlu0.b32.cont [12/16] 0.0, 128
    %155 = vxpose.xlu0.b32.cont [13/16] 0.0, 128
    %156 = vxpose.xlu0.b32.cont [14/16] 0.0, 128
    %157 = vxpose.xlu0.b32.cont [15/16] 0.0, 128
    %158 = vxpose.xlu0.b32.end [16/16] 0.0, 128
    %v159 = vpop.trf.xlu0
    %v160 = vpop.trf.xlu0
    %v161 = vpop.trf.xlu0
    %v162 = vpop.trf.xlu0
    %v163 = vpop.trf.xlu0
    %v164 = vpop.trf.xlu0
    %v165 = vpop.trf.xlu0
    %v166 = vpop.trf.xlu0
    %v167 = vpop.trf.xlu0
    %v168 = vpop.trf.xlu0
    %v169 = vpop.trf.xlu0
    %v170 = vpop.trf.xlu0
    %v171 = vpop.trf.xlu0
    %v172 = vpop.trf.xlu0
    %v173 = vpop.trf.xlu0
    %v174 = vpop.trf.xlu0
    %v176 = vsel %vm36, %v159, 0
    %v179 = vsel %vm36, %v160, 0
    %181 = vmatprep.subr.mxu0 0.0
    %182 = vmatpush1.msra.mxu0 %v118
    %183 = vmatprep.subr.mxu0 0.0
    %184 = vmatpush1.msra.mxu0 %v119
    %185 = vmatprep.subr.mxu0 0.0
    %186 = vmatpush1.msra.mxu0 %v120
    %187 = vmatprep.subr.mxu0 0.0
    %188 = vmatpush1.msra.mxu0 %v121
    %189 = vmatprep.subr.mxu0 0.0
    %190 = vmatpush1.msra.mxu0 0.0
    %191 = vmatprep.subr.mxu0 0.0
    %192 = vmatpush1.msra.mxu0 0.0
    %193 = vmatprep.subr.mxu0 0.0
    %194 = vmatpush1.msra.mxu0 0.0
    %195 = vmatprep.subr.mxu0 0.0
    %196 = vmatpush1.msra.mxu0 0.0
    %197 = vmatprep.subr.mxu0 0.0
    %198 = vmatpush1.msra.mxu0 0.0
    %199 = vmatprep.subr.mxu0 0.0
    %200 = vmatpush1.msra.mxu0 0.0
    %201 = vmatprep.subr.mxu0 0.0
    %202 = vmatpush1.msra.mxu0 0.0
    %203 = vmatprep.subr.mxu0 0.0
    %204 = vmatpush1.msra.mxu0 0.0
    %205 = vmatprep.subr.mxu0 0.0
    %206 = vmatpush1.msra.mxu0 0.0
    %207 = vmatprep.subr.mxu0 0.0
    %208 = vmatpush1.msra.mxu0 0.0
    %209 = vmatprep.subr.mxu0 0.0
    %210 = vmatpush1.msra.mxu0 0.0
    %211 = vmatprep.subr.mxu0 0.0
    %212 = vmatpush1.msra.mxu0 0.0
    %213 = vmatprep.subr.mxu0 0.0
    %214 = vmatpush1.msra.mxu0 0.0
    %215 = vmatprep.subr.mxu0 0.0
    %216 = vmatpush1.msra.mxu0 0.0
    %217 = vmatprep.subr.mxu0 0.0
    %218 = vmatpush1.msra.mxu0 0.0
    %219 = vmatprep.subr.mxu0 0.0
    %220 = vmatpush1.msra.mxu0 0.0
    %221 = vmatprep.subr.mxu0 0.0
    %222 = vmatpush1.msra.mxu0 0.0
    %223 = vmatprep.subr.mxu0 0.0
    %224 = vmatpush1.msra.mxu0 0.0
    %225 = vmatprep.subr.mxu0 0.0
    %226 = vmatpush1.msra.mxu0 0.0
    %227 = vmatprep.subr.mxu0 0.0
    %228 = vmatpush1.msra.mxu0 0.0
    %229 = vmatprep.subr.mxu0 0.0
    %230 = vmatpush1.msra.mxu0 0.0
    %231 = vmatprep.subr.mxu0 0.0
    %232 = vmatpush1.msra.mxu0 0.0
    %233 = vmatprep.subr.mxu0 0.0
    %234 = vmatpush1.msra.mxu0 0.0
    %235 = vmatprep.subr.mxu0 0.0
    %236 = vmatpush1.msra.mxu0 0.0
    %237 = vmatprep.subr.mxu0 0.0
    %238 = vmatpush1.msra.mxu0 0.0
    %239 = vmatprep.subr.mxu0 0.0
    %240 = vmatpush1.msra.mxu0 0.0
    %241 = vmatprep.subr.mxu0 0.0
    %242 = vmatpush1.msra.mxu0 0.0
    %243 = vmatprep.subr.mxu0 0.0
    %244 = vmatpush1.msra.mxu0 0.0
    %245 = vmatprep.mubr.f32.mxu0 0.0
    %246 = vmatmul.mubr.f32.gmra.mrb[0].mxu0 %v176
    %v247 = vpop.f32.mrb[0].mxu0
    %v248 = vadd.f32 %v122, %v247
    %v249 = vpop.f32.mrb[0].mxu0
    %250 = vmatprep.mubr.f32.mxu0 0.0
    %251 = vmatmul.mubr.f32.gmra.mrb[0].mxu0 %v179
    %v252 = vpop.f32.mrb[0].mxu0
    %v253 = vadd.f32 %v123, %v252
    %v254 = vpop.f32.mrb[0].mxu0
    %255 = vdwg.mxu0
    %v256 = vmul.f32 %v248, 0.125
    %v257 = vmul.f32 %v253, 0.125
    %v258 = vmul.f32 %v256, %v248
    %v259 = vmul.f32 %v257, %v253
    %v260 = vmul.f32 %v248, 0.25
    %v261 = vmul.f32 %v253, 0.25
    %v262 = vadd.f32 %v258, %v260
    %v263 = vadd.f32 %v259, %v261
    %v264 = vadd.f32 %v262, 0.5
    %v265 = vadd.f32 %v263, 0.5
    %266 = vst.msk [vmem:[#allocation3] sm:$0xff] %vm36, %v264
    %s267 = scalar_lea.vmem [#allocation3], 16
    %268 = vst.msk [vmem:[%s267] sm:$0xff] %vm36, %v265
    %269 = vst.msk [vmem:[#allocation2] sm:$0xff] %vm124, %v115
    %271 = vrot.lane.b32.xlu0 %v115, 112
    %v272 = vpop.permute.xlu0 %271
    %274 = vst.msk [vmem:[#allocation2 + $0x8] sm:$0xff] %vm124, %v272
    %275 = vrot.lane.b32.xlu0 %v115, 96
    %v276 = vpop.permute.xlu0 %275
    %278 = vst.msk [vmem:[#allocation2 + $0x10] sm:$0xff] %vm124, %v276
    %279 = vrot.lane.b32.xlu0 %v115, 80
    %v280 = vpop.permute.xlu0 %279
    %282 = vst.msk [vmem:[#allocation2 + $0x18] sm:$0xff] %vm124, %v280
    %v283 = vld [vmem:[#allocation2] sm:$0xff]
    %v284 = vld [vmem:[#allocation2 + $0x8] sm:$0xff]
    %v285 = vld [vmem:[#allocation2 + $0x10] sm:$0xff]
    %v286 = vld [vmem:[#allocation2 + $0x18] sm:$0xff]
    %287 = vxpose.xlu0.b32.start [1/16] %v283, 128
    %288 = vxpose.xlu0.b32.cont [2/16] %v284, 128
    %289 = vxpose.xlu0.b32.cont [3/16] %v285, 128
    %290 = vxpose.xlu0.b32.cont [4/16] %v286, 128
    %291 = vxpose.xlu0.b32.cont [5/16] 0.0, 128
    %292 = vxpose.xlu0.b32.cont [6/16] 0.0, 128
    %293 = vxpose.xlu0.b32.cont [7/16] 0.0, 128
    %294 = vxpose.xlu0.b32.cont [8/16] 0.0, 128
    %295 = vxpose.xlu0.b32.cont [9/16] 0.0, 128
    %296 = vxpose.xlu0.b32.cont [10/16] 0.0, 128
    %297 = vxpose.xlu0.b32.cont [11/16] 0.0, 128
    %298 = vxpose.xlu0.b32.cont [12/16] 0.0, 128
    %299 = vxpose.xlu0.b32.cont [13/16] 0.0, 128
    %300 = vxpose.xlu0.b32.cont [14/16] 0.0, 128
    %301 = vxpose.xlu0.b32.cont [15/16] 0.0, 128
    %302 = vxpose.xlu0.b32.end [16/16] 0.0, 128
    %v303 = vpop.trf.xlu0
    %v304 = vpop.trf.xlu0
    %v305 = vpop.trf.xlu0
    %v306 = vpop.trf.xlu0
    %v307 = vpop.trf.xlu0
    %v308 = vpop.trf.xlu0
    %v309 = vpop.trf.xlu0
    %v310 = vpop.trf.xlu0
    %v311 = vpop.trf.xlu0
    %v312 = vpop.trf.xlu0
    %v313 = vpop.trf.xlu0
    %v314 = vpop.trf.xlu0
    %v315 = vpop.trf.xlu0
    %v316 = vpop.trf.xlu0
    %v317 = vpop.trf.xlu0
    %v318 = vpop.trf.xlu0
    %v320 = vsel %vm36, %v303, 0
    %v323 = vsel %vm36, %v304, 0
    %325 = vmatprep.subr.mxu0 0.0
    %326 = vmatpush1.msra.mxu0 %v118
    %327 = vmatprep.subr.mxu0 0.0
    %328 = vmatpush1.msra.mxu0 %v119
    %329 = vmatprep.subr.mxu0 0.0
    %330 = vmatpush1.msra.mxu0 %v120
    %331 = vmatprep.subr.mxu0 0.0
    %332 = vmatpush1.msra.mxu0 %v121
    %333 = vmatprep.subr.mxu0 0.0
    %334 = vmatpush1.msra.mxu0 0.0
    %335 = vmatprep.subr.mxu0 0.0
    %336 = vmatpush1.msra.mxu0 0.0
    %337 = vmatprep.subr.mxu0 0.0
    %338 = vmatpush1.msra.mxu0 0.0
    %339 = vmatprep.subr.mxu0 0.0
    %340 = vmatpush1.msra.mxu0 0.0
    %341 = vmatprep.subr.mxu0 0.0
    %342 = vmatpush1.msra.mxu0 0.0
    %343 = vmatprep.subr.mxu0 0.0
    %344 = vmatpush1.msra.mxu0 0.0
    %345 = vmatprep.subr.mxu0 0.0
    %346 = vmatpush1.msra.mxu0 0.0
    %347 = vmatprep.subr.mxu0 0.0
    %348 = vmatpush1.msra.mxu0 0.0
    %349 = vmatprep.subr.mxu0 0.0
    %350 = vmatpush1.msra.mxu0 0.0
    %351 = vmatprep.subr.mxu0 0.0
    %352 = vmatpush1.msra.mxu0 0.0
    %353 = vmatprep.subr.mxu0 0.0
    %354 = vmatpush1.msra.mxu0 0.0
    %355 = vmatprep.subr.mxu0 0.0
    %356 = vmatpush1.msra.mxu0 0.0
    %357 = vmatprep.subr.mxu0 0.0
    %358 = vmatpush1.msra.mxu0 0.0
    %359 = vmatprep.subr.mxu0 0.0
    %360 = vmatpush1.msra.mxu0 0.0
    %361 = vmatprep.subr.mxu0 0.0
    %362 = vmatpush1.msra.mxu0 0.0
    %363 = vmatprep.subr.mxu0 0.0
    %364 = vmatpush1.msra.mxu0 0.0
    %365 = vmatprep.subr.mxu0 0.0
    %366 = vmatpush1.msra.mxu0 0.0
    %367 = vmatprep.subr.mxu0 0.0
    %368 = vmatpush1.msra.mxu0 0.0
    %369 = vmatprep.subr.mxu0 0.0
    %370 = vmatpush1.msra.mxu0 0.0
    %371 = vmatprep.subr.mxu0 0.0
    %372 = vmatpush1.msra.mxu0 0.0
    %373 = vmatprep.subr.mxu0 0.0
    %374 = vmatpush1.msra.mxu0 0.0
    %375 = vmatprep.subr.mxu0 0.0
    %376 = vmatpush1.msra.mxu0 0.0
    %377 = vmatprep.subr.mxu0 0.0
    %378 = vmatpush1.msra.mxu0 0.0
    %379 = vmatprep.subr.mxu0 0.0
    %380 = vmatpush1.msra.mxu0 0.0
    %381 = vmatprep.subr.mxu0 0.0
    %382 = vmatpush1.msra.mxu0 0.0
    %383 = vmatprep.subr.mxu0 0.0
    %384 = vmatpush1.msra.mxu0 0.0
    %385 = vmatprep.subr.mxu0 0.0
    %386 = vmatpush1.msra.mxu0 0.0
    %387 = vmatprep.subr.mxu0 0.0
    %388 = vmatpush1.msra.mxu0 0.0
    %389 = vmatprep.mubr.f32.mxu0 0.0
    %390 = vmatmul.mubr.f32.gmra.mrb[0].mxu0 %v320
    %v391 = vpop.f32.mrb[0].mxu0
    %v392 = vadd.f32 %v122, %v391
    %v393 = vpop.f32.mrb[0].mxu0
    %394 = vmatprep.mubr.f32.mxu0 0.0
    %395 = vmatmul.mubr.f32.gmra.mrb[0].mxu0 %v323
    %v396 = vpop.f32.mrb[0].mxu0
    %v397 = vadd.f32 %v123, %v396
    %v398 = vpop.f32.mrb[0].mxu0
    %399 = vdwg.mxu0
    %v400 = vmul.f32 %v392, 0.125
    %v401 = vmul.f32 %v397, 0.125
    %v402 = vmul.f32 %v400, %v392
    %v403 = vmul.f32 %v401, %v397
    %v404 = vmul.f32 %v392, 0.25
    %v405 = vmul.f32 %v397, 0.25
    %v406 = vadd.f32 %v402, %v404
    %v407 = vadd.f32 %v403, %v405
    %v408 = vadd.f32 %v406, 0.5
    %v409 = vadd.f32 %v407, 0.5
    %410 = vst.msk [vmem:[#allocation3 + $0x8] sm:$0xff] %vm36, %v408
    %411 = vst.msk [vmem:[%s267 + $0x8] sm:$0xff] %vm36, %v409
    %v412 = vld [vmem:[%s2] sm:$0xff]
    %v413 = vld [vmem:[%s2 + $0x8] sm:$0xff]
    %v414 = vld [vmem:[%s2 + $0x10] sm:$0xff]
    %v415 = vld [vmem:[%s2 + $0x18] sm:$0xff]
    %v416 = vld [vmem:[%s2 + $0x20] sm:$0xff]
    %v417 = vld [vmem:[%s2 + $0x28] sm:$0xff]
    %v418 = vld [vmem:[%s2 + $0x30] sm:$0xff]
    %v419 = vld [vmem:[%s2 + $0x38] sm:$0xff]
    %v420 = vld [vmem:[#allocation3] sm:$0xff]
    %v421 = vld [vmem:[#allocation3 + $0x8] sm:$0xff]
    %v422 = vld [vmem:[%s267] sm:$0xff]
    %v423 = vld [vmem:[%s267 + $0x8] sm:$0xff]
    %v425 = vsel %vm36, %v422, 0
    %v428 = vsel %vm36, %v423, 0
    %430 = vmatprep.subr.mxu0 0.0
    %431 = vmatpush1.msra.mxu0 %v416
    %432 = vmatprep.subr.mxu0 0.0
    %433 = vmatpush1.msra.mxu0 %v417
    %434 = vmatprep.subr.mxu0 0.0
    %435 = vmatpush1.msra.mxu0 %v418
    %436 = vmatprep.subr.mxu0 0.0
    %437 = vmatpush1.msra.mxu0 %v419
    %438 = vmatprep.subr.mxu0 0.0
    %439 = vmatpush1.msra.mxu0 0.0
    %440 = vmatprep.subr.mxu0 0.0
    %441 = vmatpush1.msra.mxu0 0.0
    %442 = vmatprep.subr.mxu0 0.0
    %443 = vmatpush1.msra.mxu0 0.0
    %444 = vmatprep.subr.mxu0 0.0
    %445 = vmatpush1.msra.mxu0 0.0
    %446 = vmatprep.subr.mxu0 0.0
    %447 = vmatpush1.msra.mxu0 0.0
    %448 = vmatprep.subr.mxu0 0.0
    %449 = vmatpush1.msra.mxu0 0.0
    %450 = vmatprep.subr.mxu0 0.0
    %451 = vmatpush1.msra.mxu0 0.0
    %452 = vmatprep.subr.mxu0 0.0
    %453 = vmatpush1.msra.mxu0 0.0
    %454 = vmatprep.subr.mxu0 0.0
    %455 = vmatpush1.msra.mxu0 0.0
    %456 = vmatprep.subr.mxu0 0.0
    %457 = vmatpush1.msra.mxu0 0.0
    %458 = vmatprep.subr.mxu0 0.0
    %459 = vmatpush1.msra.mxu0 0.0
    %460 = vmatprep.subr.mxu0 0.0
    %461 = vmatpush1.msra.mxu0 0.0
    %462 = vmatprep.subr.mxu0 0.0
    %463 = vmatpush1.msra.mxu0 0.0
    %464 = vmatprep.subr.mxu0 0.0
    %465 = vmatpush1.msra.mxu0 0.0
    %466 = vmatprep.subr.mxu0 0.0
    %467 = vmatpush1.msra.mxu0 0.0
    %468 = vmatprep.subr.mxu0 0.0
    %469 = vmatpush1.msra.mxu0 0.0
    %470 = vmatprep.subr.mxu0 0.0
    %471 = vmatpush1.msra.mxu0 0.0
    %472 = vmatprep.subr.mxu0 0.0
    %473 = vmatpush1.msra.mxu0 0.0
    %474 = vmatprep.subr.mxu0 0.0
    %475 = vmatpush1.msra.mxu0 0.0
    %476 = vmatprep.subr.mxu0 0.0
    %477 = vmatpush1.msra.mxu0 0.0
    %478 = vmatprep.subr.mxu0 0.0
    %479 = vmatpush1.msra.mxu0 0.0
    %480 = vmatprep.subr.mxu0 0.0
    %481 = vmatpush1.msra.mxu0 0.0
    %482 = vmatprep.subr.mxu0 0.0
    %483 = vmatpush1.msra.mxu0 0.0
    %484 = vmatprep.subr.mxu0 0.0
    %485 = vmatpush1.msra.mxu0 0.0
    %486 = vmatprep.subr.mxu0 0.0
    %487 = vmatpush1.msra.mxu0 0.0
    %488 = vmatprep.subr.mxu0 0.0
    %489 = vmatpush1.msra.mxu0 0.0
    %490 = vmatprep.subr.mxu0 0.0
    %491 = vmatpush1.msra.mxu0 0.0
    %492 = vmatprep.subr.mxu0 0.0
    %493 = vmatpush1.msra.mxu0 0.0
    %494 = vmatprep.mubr.f32.mxu0 0.0
    %495 = vmatmul.mubr.f32.gmra.mrb[0].mxu0 %v425
    %v496 = vpop.f32.mrb[0].mxu0
    %v497 = vadd.f32 0.0, %v496
    %v498 = vpop.f32.mrb[0].mxu0
    %499 = vmatprep.mubr.f32.mxu0 0.0
    %500 = vmatmul.mubr.f32.gmra.mrb[0].mxu0 %v428
    %v501 = vpop.f32.mrb[0].mxu0
    %v502 = vadd.f32 0.0, %v501
    %v503 = vpop.f32.mrb[0].mxu0
    %504 = vdwg.mxu0
    %v506 = vsel %vm36, %v420, 0
    %v509 = vsel %vm36, %v421, 0
    %511 = vmatprep.subr.mxu0 0.0
    %512 = vmatpush1.msra.mxu0 %v412
    %513 = vmatprep.subr.mxu0 0.0
    %514 = vmatpush1.msra.mxu0 %v413
    %515 = vmatprep.subr.mxu0 0.0
    %516 = vmatpush1.msra.mxu0 %v414
    %517 = vmatprep.subr.mxu0 0.0
    %518 = vmatpush1.msra.mxu0 %v415
    %519 = vmatprep.subr.mxu0 0.0
    %520 = vmatpush1.msra.mxu0 0.0
    %521 = vmatprep.subr.mxu0 0.0
    %522 = vmatpush1.msra.mxu0 0.0
    %523 = vmatprep.subr.mxu0 0.0
    %524 = vmatpush1.msra.mxu0 0.0
    %525 = vmatprep.subr.mxu0 0.0
    %526 = vmatpush1.msra.mxu0 0.0
    %527 = vmatprep.subr.mxu0 0.0
    %528 = vmatpush1.msra.mxu0 0.0
    %529 = vmatprep.subr.mxu0 0.0
    %530 = vmatpush1.msra.mxu0 0.0
    %531 = vmatprep.subr.mxu0 0.0
    %532 = vmatpush1.msra.mxu0 0.0
    %533 = vmatprep.subr.mxu0 0.0
    %534 = vmatpush1.msra.mxu0 0.0
    %535 = vmatprep.subr.mxu0 0.0
    %536 = vmatpush1.msra.mxu0 0.0
    %537 = vmatprep.subr.mxu0 0.0
    %538 = vmatpush1.msra.mxu0 0.0
    %539 = vmatprep.subr.mxu0 0.0
    %540 = vmatpush1.msra.mxu0 0.0
    %541 = vmatprep.subr.mxu0 0.0
    %542 = vmatpush1.msra.mxu0 0.0
    %543 = vmatprep.subr.mxu0 0.0
    %544 = vmatpush1.msra.mxu0 0.0
    %545 = vmatprep.subr.mxu0 0.0
    %546 = vmatpush1.msra.mxu0 0.0
    %547 = vmatprep.subr.mxu0 0.0
    %548 = vmatpush1.msra.mxu0 0.0
    %549 = vmatprep.subr.mxu0 0.0
    %550 = vmatpush1.msra.mxu0 0.0
    %551 = vmatprep.subr.mxu0 0.0
    %552 = vmatpush1.msra.mxu0 0.0
    %553 = vmatprep.subr.mxu0 0.0
    %554 = vmatpush1.msra.mxu0 0.0
    %555 = vmatprep.subr.mxu0 0.0
    %556 = vmatpush1.msra.mxu0 0.0
    %557 = vmatprep.subr.mxu0 0.0
    %558 = vmatpush1.msra.mxu0 0.0
    %559 = vmatprep.subr.mxu0 0.0
    %560 = vmatpush1.msra.mxu0 0.0
    %561 = vmatprep.subr.mxu0 0.0
    %562 = vmatpush1.msra.mxu0 0.0
    %563 = vmatprep.subr.mxu0 0.0
    %564 = vmatpush1.msra.mxu0 0.0
    %565 = vmatprep.subr.mxu0 0.0
    %566 = vmatpush1.msra.mxu0 0.0
    %567 = vmatprep.subr.mxu0 0.0
    %568 = vmatpush1.msra.mxu0 0.0
    %569 = vmatprep.subr.mxu0 0.0
    %570 = vmatpush1.msra.mxu0 0.0
    %571 = vmatprep.subr.mxu0 0.0
    %572 = vmatpush1.msra.mxu0 0.0
    %573 = vmatprep.subr.mxu0 0.0
    %574 = vmatpush1.msra.mxu0 0.0
    %575 = vmatprep.mubr.f32.mxu0 0.0
    %576 = vmatmul.mubr.f32.gmra.mrb[0].mxu0 %v506
    %v577 = vpop.f32.mrb[0].mxu0
    %v578 = vadd.f32 %v497, %v577
    %v579 = vpop.f32.mrb[0].mxu0
    %580 = vmatprep.mubr.f32.mxu0 0.0
    %581 = vmatmul.mubr.f32.gmra.mrb[0].mxu0 %v509
    %v582 = vpop.f32.mrb[0].mxu0
    %v583 = vadd.f32 %v502, %v582
    %v584 = vpop.f32.mrb[0].mxu0
    %585 = vdwg.mxu0
    %v586 = vld [vmem:[%s3] sm:$0xff]
    %v587 = vld [vmem:[%s3 + $0x8] sm:$0xff]
    %v588 = vld [vmem:[%s3 + $0x10] sm:$0xff]
    %v589 = vld [vmem:[%s3 + $0x18] sm:$0xff]
    %v591 = vsel %vm36, %v578, 0
    %v594 = vsel %vm36, %v583, 0
    %596 = vmatprep.subr.mxu0 0.0
    %597 = vmatpush1.msra.mxu0 %v586
    %598 = vmatprep.subr.mxu0 0.0
    %599 = vmatpush1.msra.mxu0 %v587
    %600 = vmatprep.subr.mxu0 0.0
    %601 = vmatpush1.msra.mxu0 %v588
    %602 = vmatprep.subr.mxu0 0.0
    %603 = vmatpush1.msra.mxu0 %v589
    %604 = vmatprep.subr.mxu0 0.0
    %605 = vmatpush1.msra.mxu0 0.0
    %606 = vmatprep.subr.mxu0 0.0
    %607 = vmatpush1.msra.mxu0 0.0
    %608 = vmatprep.subr.mxu0 0.0
    %609 = vmatpush1.msra.mxu0 0.0
    %610 = vmatprep.subr.mxu0 0.0
    %611 = vmatpush1.msra.mxu0 0.0
    %612 = vmatprep.subr.mxu0 0.0
    %613 = vmatpush1.msra.mxu0 0.0
    %614 = vmatprep.subr.mxu0 0.0
    %615 = vmatpush1.msra.mxu0 0.0
    %616 = vmatprep.subr.mxu0 0.0
    %617 = vmatpush1.msra.mxu0 0.0
    %618 = vmatprep.subr.mxu0 0.0
    %619 = vmatpush1.msra.mxu0 0.0
    %620 = vmatprep.subr.mxu0 0.0
    %621 = vmatpush1.msra.mxu0 0.0
    %622 = vmatprep.subr.mxu0 0.0
    %623 = vmatpush1.msra.mxu0 0.0
    %624 = vmatprep.subr.mxu0 0.0
    %625 = vmatpush1.msra.mxu0 0.0
    %626 = vmatprep.subr.mxu0 0.0
    %627 = vmatpush1.msra.mxu0 0.0
    %628 = vmatprep.subr.mxu0 0.0
    %629 = vmatpush1.msra.mxu0 0.0
    %630 = vmatprep.subr.mxu0 0.0
    %631 = vmatpush1.msra.mxu0 0.0
    %632 = vmatprep.subr.mxu0 0.0
    %633 = vmatpush1.msra.mxu0 0.0
    %634 = vmatprep.subr.mxu0 0.0
    %635 = vmatpush1.msra.mxu0 0.0
    %636 = vmatprep.subr.mxu0 0.0
    %637 = vmatpush1.msra.mxu0 0.0
    %638 = vmatprep.subr.mxu0 0.0
    %639 = vmatpush1.msra.mxu0 0.0
    %640 = vmatprep.subr.mxu0 0.0
    %641 = vmatpush1.msra.mxu0 0.0
    %642 = vmatprep.subr.mxu0 0.0
    %643 = vmatpush1.msra.mxu0 0.0
    %644 = vmatprep.subr.mxu0 0.0
    %645 = vmatpush1.msra.mxu0 0.0
    %646 = vmatprep.subr.mxu0 0.0
    %647 = vmatpush1.msra.mxu0 0.0
    %648 = vmatprep.subr.mxu0 0.0
    %649 = vmatpush1.msra.mxu0 0.0
    %650 = vmatprep.subr.mxu0 0.0
    %651 = vmatpush1.msra.mxu0 0.0
    %652 = vmatprep.subr.mxu0 0.0
    %653 = vmatpush1.msra.mxu0 0.0
    %654 = vmatprep.subr.mxu0 0.0
    %655 = vmatpush1.msra.mxu0 0.0
    %656 = vmatprep.subr.mxu0 0.0
    %657 = vmatpush1.msra.mxu0 0.0
    %658 = vmatprep.subr.mxu0 0.0
    %659 = vmatpush1.msra.mxu0 0.0
    %660 = vmatprep.mubr.f32.mxu0 0.0
    %661 = vmatmul.mubr.f32.gmra.mrb[0].mxu0 %v591
    %v662 = vpop.f32.mrb[0].mxu0
    %v663 = vadd.f32 0.0, %v662
    %v664 = vpop.f32.mrb[0].mxu0
    %665 = vmatprep.mubr.f32.mxu0 0.0
    %666 = vmatmul.mubr.f32.gmra.mrb[0].mxu0 %v594
    %v667 = vpop.f32.mrb[0].mxu0
    %v668 = vadd.f32 0.0, %v667
    %v669 = vpop.f32.mrb[0].mxu0
    %670 = vdwg.mxu0
    %s671 = scalar_lea.vmem %s6, 32
    %v672 = vld [vmem:[%s671] sm:$0xff]
    %v673 = vld [vmem:[%s671 + $0x8] sm:$0xff]
    %v674 = vld [vmem:[%s671 + $0x10] sm:$0xff]
    %v675 = vld [vmem:[%s671 + $0x18] sm:$0xff]
    %s676 = scalar_lea.vmem %s7, 16
    %v677 = vld [vmem:[%s676] sm:$0xff]
    %v678 = vld [vmem:[%s676 + $0x8] sm:$0xff]
    %679 = vst.msk [vmem:[#allocation2] sm:$0xff] %vm124, %v663
    %681 = vrot.lane.b32.xlu0 %v663, 112
    %v682 = vpop.permute.xlu0 %681
    %684 = vst.msk [vmem:[#allocation2 + $0x8] sm:$0xff] %vm124, %v682
    %685 = vrot.lane.b32.xlu0 %v663, 96
    %v686 = vpop.permute.xlu0 %685
    %688 = vst.msk [vmem:[#allocation2 + $0x10] sm:$0xff] %vm124, %v686
    %689 = vrot.lane.b32.xlu0 %v663, 80
    %v690 = vpop.permute.xlu0 %689
    %692 = vst.msk [vmem:[#allocation2 + $0x18] sm:$0xff] %vm124, %v690
    %v693 = vld [vmem:[#allocation2] sm:$0xff]
    %v694 = vld [vmem:[#allocation2 + $0x8] sm:$0xff]
    %v695 = vld [vmem:[#allocation2 + $0x10] sm:$0xff]
    %v696 = vld [vmem:[#allocation2 + $0x18] sm:$0xff]
    %697 = vxpose.xlu0.b32.start [1/16] %v693, 128
    %698 = vxpose.xlu0.b32.cont [2/16] %v694, 128
    %699 = vxpose.xlu0.b32.cont [3/16] %v695, 128
    %700 = vxpose.xlu0.b32.cont [4/16] %v696, 128
    %701 = vxpose.xlu0.b32.cont [5/16] 0.0, 128
    %702 = vxpose.xlu0.b32.cont [6/16] 0.0, 128
    %703 = vxpose.xlu0.b32.cont [7/16] 0.0, 128
    %704 = vxpose.xlu0.b32.cont [8/16] 0.0, 128
    %705 = vxpose.xlu0.b32.cont [9/16] 0.0, 128
    %706 = vxpose.xlu0.b32.cont [10/16] 0.0, 128
    %707 = vxpose.xlu0.b32.cont [11/16] 0.0, 128
    %708 = vxpose.xlu0.b32.cont [12/16] 0.0, 128
    %709 = vxpose.xlu0.b32.cont [13/16] 0.0, 128
    %710 = vxpose.xlu0.b32.cont [14/16] 0.0, 128
    %711 = vxpose.xlu0.b32.cont [15/16] 0.0, 128
    %712 = vxpose.xlu0.b32.end [16/16] 0.0, 128
    %v713 = vpop.trf.xlu0
    %v714 = vpop.trf.xlu0
    %v715 = vpop.trf.xlu0
    %v716 = vpop.trf.xlu0
    %v717 = vpop.trf.xlu0
    %v718 = vpop.trf.xlu0
    %v719 = vpop.trf.xlu0
    %v720 = vpop.trf.xlu0
    %v721 = vpop.trf.xlu0
    %v722 = vpop.trf.xlu0
    %v723 = vpop.trf.xlu0
    %v724 = vpop.trf.xlu0
    %v725 = vpop.trf.xlu0
    %v726 = vpop.trf.xlu0
    %v727 = vpop.trf.xlu0
    %v728 = vpop.trf.xlu0
    %v730 = vsel %vm36, %v713, 0
    %v733 = vsel %vm36, %v714, 0
    %735 = vmatprep.subr.mxu0 0.0
    %736 = vmatpush1.msra.mxu0 %v672
    %737 = vmatprep.subr.mxu0 0.0
    %738 = vmatpush1.msra.mxu0 %v673
    %739 = vmatprep.subr.mxu0 0.0
    %740 = vmatpush1.msra.mxu0 %v674
    %741 = vmatprep.subr.mxu0 0.0
    %742 = vmatpush1.msra.mxu0 %v675
    %743 = vmatprep.subr.mxu0 0.0
    %744 = vmatpush1.msra.mxu0 0.0
    %745 = vmatprep.subr.mxu0 0.0
    %746 = vmatpush1.msra.mxu0 0.0
    %747 = vmatprep.subr.mxu0 0.0
    %748 = vmatpush1.msra.mxu0 0.0
    %749 = vmatprep.subr.mxu0 0.0
    %750 = vmatpush1.msra.mxu0 0.0
    %751 = vmatprep.subr.mxu0 0.0
    %752 = vmatpush1.msra.mxu0 0.0
    %753 = vmatprep.subr.mxu0 0.0
    %754 = vmatpush1.msra.mxu0 0.0
    %755 = vmatprep.subr.mxu0 0.0
    %756 = vmatpush1.msra.mxu0 0.0
    %757 = vmatprep.subr.mxu0 0.0
    %758 = vmatpush1.msra.mxu0 0.0
    %759 = vmatprep.subr.mxu0 0.0
    %760 = vmatpush1.msra.mxu0 0.0
    %761 = vmatprep.subr.mxu0 0.0
    %762 = vmatpush1.msra.mxu0 0.0
    %763 = vmatprep.subr.mxu0 0.0
    %764 = vmatpush1.msra.mxu0 0.0
    %765 = vmatprep.subr.mxu0 0.0
    %766 = vmatpush1.msra.mxu0 0.0
    %767 = vmatprep.subr.mxu0 0.0
    %768 = vmatpush1.msra.mxu0 0.0
    %769 = vmatprep.subr.mxu0 0.0
    %770 = vmatpush1.msra.mxu0 0.0
    %771 = vmatprep.subr.mxu0 0.0
    %772 = vmatpush1.msra.mxu0 0.0
    %773 = vmatprep.subr.mxu0 0.0
    %774 = vmatpush1.msra.mxu0 0.0
    %775 = vmatprep.subr.mxu0 0.0
    %776 = vmatpush1.msra.mxu0 0.0
    %777 = vmatprep.subr.mxu0 0.0
    %778 = vmatpush1.msra.mxu0 0.0
    %779 = vmatprep.subr.mxu0 0.0
    %780 = vmatpush1.msra.mxu0 0.0
    %781 = vmatprep.subr.mxu0 0.0
    %782 = vmatpush1.msra.mxu0 0.0
    %783 = vmatprep.subr.mxu0 0.0
    %784 = vmatpush1.msra.mxu0 0.0
    %785 = vmatprep.subr.mxu0 0.0
    %786 = vmatpush1.msra.mxu0 0.0
    %787 = vmatprep.subr.mxu0 0.0
    %788 = vmatpush1.msra.mxu0 0.0
    %789 = vmatprep.subr.mxu0 0.0
    %790 = vmatpush1.msra.mxu0 0.0
    %791 = vmatprep.subr.mxu0 0.0
    %792 = vmatpush1.msra.mxu0 0.0
    %793 = vmatprep.subr.mxu0 0.0
    %794 = vmatpush1.msra.mxu0 0.0
    %795 = vmatprep.subr.mxu0 0.0
    %796 = vmatpush1.msra.mxu0 0.0
    %797 = vmatprep.subr.mxu0 0.0
    %798 = vmatpush1.msra.mxu0 0.0
    %799 = vmatprep.mubr.f32.mxu0 0.0
    %800 = vmatmul.mubr.f32.gmra.mrb[0].mxu0 %v730
    %v801 = vpop.f32.mrb[0].mxu0
    %v802 = vadd.f32 %v677, %v801
    %v803 = vpop.f32.mrb[0].mxu0
    %804 = vmatprep.mubr.f32.mxu0 0.0
    %805 = vmatmul.mubr.f32.gmra.mrb[0].mxu0 %v733
    %v806 = vpop.f32.mrb[0].mxu0
    %v807 = vadd.f32 %v678, %v806
    %v808 = vpop.f32.mrb[0].mxu0
    %809 = vdwg.mxu0
    %v810 = vmul.f32 %v802, 0.125
    %v811 = vmul.f32 %v807, 0.125
    %v812 = vmul.f32 %v810, %v802
    %v813 = vmul.f32 %v811, %v807
    %v814 = vmul.f32 %v802, 0.25
    %v815 = vmul.f32 %v807, 0.25
    %v816 = vadd.f32 %v812, %v814
    %v817 = vadd.f32 %v813, %v815
    %v818 = vadd.f32 %v816, 0.5
    %v819 = vadd.f32 %v817, 0.5
    %820 = vst.msk [vmem:[#allocation3] sm:$0xff] %vm36, %v818
    %821 = vst.msk [vmem:[%s267] sm:$0xff] %vm36, %v819
    %822 = vst.msk [vmem:[#allocation2] sm:$0xff] %vm124, %v668
    %824 = vrot.lane.b32.xlu0 %v668, 112
    %v825 = vpop.permute.xlu0 %824
    %827 = vst.msk [vmem:[#allocation2 + $0x8] sm:$0xff] %vm124, %v825
    %828 = vrot.lane.b32.xlu0 %v668, 96
    %v829 = vpop.permute.xlu0 %828
    %831 = vst.msk [vmem:[#allocation2 + $0x10] sm:$0xff] %vm124, %v829
    %832 = vrot.lane.b32.xlu0 %v668, 80
    %v833 = vpop.permute.xlu0 %832
    %835 = vst.msk [vmem:[#allocation2 + $0x18] sm:$0xff] %vm124, %v833
    %v836 = vld [vmem:[#allocation2] sm:$0xff]
    %v837 = vld [vmem:[#allocation2 + $0x8] sm:$0xff]
    %v838 = vld [vmem:[#allocation2 + $0x10] sm:$0xff]
    %v839 = vld [vmem:[#allocation2 + $0x18] sm:$0xff]
    %840 = vxpose.xlu0.b32.start [1/16] %v836, 128
    %841 = vxpose.xlu0.b32.cont [2/16] %v837, 128
    %842 = vxpose.xlu0.b32.cont [3/16] %v838, 128
    %843 = vxpose.xlu0.b32.cont [4/16] %v839, 128
    %844 = vxpose.xlu0.b32.cont [5/16] 0.0, 128
    %845 = vxpose.xlu0.b32.cont [6/16] 0.0, 128
    %846 = vxpose.xlu0.b32.cont [7/16] 0.0, 128
    %847 = vxpose.xlu0.b32.cont [8/16] 0.0, 128
    %848 = vxpose.xlu0.b32.cont [9/16] 0.0, 128
    %849 = vxpose.xlu0.b32.cont [10/16] 0.0, 128
    %850 = vxpose.xlu0.b32.cont [11/16] 0.0, 128
    %851 = vxpose.xlu0.b32.cont [12/16] 0.0, 128
    %852 = vxpose.xlu0.b32.cont [13/16] 0.0, 128
    %853 = vxpose.xlu0.b32.cont [14/16] 0.0, 128
    %854 = vxpose.xlu0.b32.cont [15/16] 0.0, 128
    %855 = vxpose.xlu0.b32.end [16/16] 0.0, 128
    %v856 = vpop.trf.xlu0
    %v857 = vpop.trf.xlu0
    %v858 = vpop.trf.xlu0
    %v859 = vpop.trf.xlu0
    %v860 = vpop.trf.xlu0
    %v861 = vpop.trf.xlu0
    %v862 = vpop.trf.xlu0
    %v863 = vpop.trf.xlu0
    %v864 = vpop.trf.xlu0
    %v865 = vpop.trf.xlu0
    %v866 = vpop.trf.xlu0
    %v867 = vpop.trf.xlu0
    %v868 = vpop.trf.xlu0
    %v869 = vpop.trf.xlu0
    %v870 = vpop.trf.xlu0
    %v871 = vpop.trf.xlu0
    %v873 = vsel %vm36, %v856, 0
    %v876 = vsel %vm36, %v857, 0
    %878 = vmatprep.subr.mxu0 0.0
    %879 = vmatpush1.msra.mxu0 %v672
    %880 = vmatprep.subr.mxu0 0.0
    %881 = vmatpush1.msra.mxu0 %v673
    %882 = vmatprep.subr.mxu0 0.0
    %883 = vmatpush1.msra.mxu0 %v674
    %884 = vmatprep.subr.mxu0 0.0
    %885 = vmatpush1.msra.mxu0 %v675
    %886 = vmatprep.subr.mxu0 0.0
    %887 = vmatpush1.msra.mxu0 0.0
    %888 = vmatprep.subr.mxu0 0.0
    %889 = vmatpush1.msra.mxu0 0.0
    %890 = vmatprep.subr.mxu0 0.0
    %891 = vmatpush1.msra.mxu0 0.0
    %892 = vmatprep.subr.mxu0 0.0
    %893 = vmatpush1.msra.mxu0 0.0
    %894 = vmatprep.subr.mxu0 0.0
    %895 = vmatpush1.msra.mxu0 0.0
    %896 = vmatprep.subr.mxu0 0.0
    %897 = vmatpush1.msra.mxu0 0.0
    %898 = vmatprep.subr.mxu0 0.0
    %899 = vmatpush1.msra.mxu0 0.0
    %900 = vmatprep.subr.mxu0 0.0
    %901 = vmatpush1.msra.mxu0 0.0
    %902 = vmatprep.subr.mxu0 0.0
    %903 = vmatpush1.msra.mxu0 0.0
    %904 = vmatprep.subr.mxu0 0.0
    %905 = vmatpush1.msra.mxu0 0.0
    %906 = vmatprep.subr.mxu0 0.0
    %907 = vmatpush1.msra.mxu0 0.0
    %908 = vmatprep.subr.mxu0 0.0
    %909 = vmatpush1.msra.mxu0 0.0
    %910 = vmatprep.subr.mxu0 0.0
    %911 = vmatpush1.msra.mxu0 0.0
    %912 = vmatprep.subr.mxu0 0.0
    %913 = vmatpush1.msra.mxu0 0.0
    %914 = vmatprep.subr.mxu0 0.0
    %915 = vmatpush1.msra.mxu0 0.0
    %916 = vmatprep.subr.mxu0 0.0
    %917 = vmatpush1.msra.mxu0 0.0
    %918 = vmatprep.subr.mxu0 0.0
    %919 = vmatpush1.msra.mxu0 0.0
    %920 = vmatprep.subr.mxu0 0.0
    %921 = vmatpush1.msra.mxu0 0.0
    %922 = vmatprep.subr.mxu0 0.0
    %923 = vmatpush1.msra.mxu0 0.0
    %924 = vmatprep.subr.mxu0 0.0
    %925 = vmatpush1.msra.mxu0 0.0
    %926 = vmatprep.subr.mxu0 0.0
    %927 = vmatpush1.msra.mxu0 0.0
    %928 = vmatprep.subr.mxu0 0.0
    %929 = vmatpush1.msra.mxu0 0.0
    %930 = vmatprep.subr.mxu0 0.0
    %931 = vmatpush1.msra.mxu0 0.0
    %932 = vmatprep.subr.mxu0 0.0
    %933 = vmatpush1.msra.mxu0 0.0
    %934 = vmatprep.subr.mxu0 0.0
    %935 = vmatpush1.msra.mxu0 0.0
    %936 = vmatprep.subr.mxu0 0.0
    %937 = vmatpush1.msra.mxu0 0.0
    %938 = vmatprep.subr.mxu0 0.0
    %939 = vmatpush1.msra.mxu0 0.0
    %940 = vmatprep.subr.mxu0 0.0
    %941 = vmatpush1.msra.mxu0 0.0
    %942 = vmatprep.mubr.f32.mxu0 0.0
    %943 = vmatmul.mubr.f32.gmra.mrb[0].mxu0 %v873
    %v944 = vpop.f32.mrb[0].mxu0
    %v945 = vadd.f32 %v677, %v944
    %v946 = vpop.f32.mrb[0].mxu0
    %947 = vmatprep.mubr.f32.mxu0 0.0
    %948 = vmatmul.mubr.f32.gmra.mrb[0].mxu0 %v876
    %v949 = vpop.f32.mrb[0].mxu0
    %v950 = vadd.f32 %v678, %v949
    %v951 = vpop.f32.mrb[0].mxu0
    %952 = vdwg.mxu0
    %v953 = vmul.f32 %v945, 0.125
    %v954 = vmul.f32 %v950, 0.125
    %v955 = vmul.f32 %v953, %v945
    %v956 = vmul.f32 %v954, %v950
    %v957 = vmul.f32 %v945, 0.25
    %v958 = vmul.f32 %v950, 0.25
    %v959 = vadd.f32 %v955, %v957
    %v960 = vadd.f32 %v956, %v958
    %v961 = vadd.f32 %v959, 0.5
    %v962 = vadd.f32 %v960, 0.5
    %963 = vst.msk [vmem:[#allocation3 + $0x8] sm:$0xff] %vm36, %v961
    %964 = vst.msk [vmem:[%s267 + $0x8] sm:$0xff] %vm36, %v962
    %s965 = scalar_lea.vmem %s2, 64
    %v966 = vld [vmem:[%s965] sm:$0xff]
    %v967 = vld [vmem:[%s965 + $0x8] sm:$0xff]
    %v968 = vld [vmem:[%s965 + $0x10] sm:$0xff]
    %v969 = vld [vmem:[%s965 + $0x18] sm:$0xff]
    %v970 = vld [vmem:[%s965 + $0x20] sm:$0xff]
    %v971 = vld [vmem:[%s965 + $0x28] sm:$0xff]
    %v972 = vld [vmem:[%s965 + $0x30] sm:$0xff]
    %v973 = vld [vmem:[%s965 + $0x38] sm:$0xff]
    %v974 = vld [vmem:[#allocation3] sm:$0xff]
    %v975 = vld [vmem:[#allocation3 + $0x8] sm:$0xff]
    %v976 = vld [vmem:[%s267] sm:$0xff]
    %v977 = vld [vmem:[%s267 + $0x8] sm:$0xff]
    %v979 = vsel %vm36, %v976, 0
    %v982 = vsel %vm36, %v977, 0
    %984 = vmatprep.subr.mxu0 0.0
    %985 = vmatpush1.msra.mxu0 %v970
    %986 = vmatprep.subr.mxu0 0.0
    %987 = vmatpush1.msra.mxu0 %v971
    %988 = vmatprep.subr.mxu0 0.0
    %989 = vmatpush1.msra.mxu0 %v972
    %990 = vmatprep.subr.mxu0 0.0
    %991 = vmatpush1.msra.mxu0 %v973
    %992 = vmatprep.subr.mxu0 0.0
    %993 = vmatpush1.msra.mxu0 0.0
    %994 = vmatprep.subr.mxu0 0.0
    %995 = vmatpush1.msra.mxu0 0.0
    %996 = vmatprep.subr.mxu0 0.0
    %997 = vmatpush1.msra.mxu0 0.0
    %998 = vmatprep.subr.mxu0 0.0
    %999 = vmatpush1.msra.mxu0 0.0
    %1000 = vmatprep.subr.mxu0 0.0
    %1001 = vmatpush1.msra.mxu0 0.0
    %1002 = vmatprep.subr.mxu0 0.0
    %1003 = vmatpush1.msra.mxu0 0.0
    %1004 = vmatprep.subr.mxu0 0.0
    %1005 = vmatpush1.msra.mxu0 0.0
    %1006 = vmatprep.subr.mxu0 0.0
    %1007 = vmatpush1.msra.mxu0 0.0
    %1008 = vmatprep.subr.mxu0 0.0
    %1009 = vmatpush1.msra.mxu0 0.0
    %1010 = vmatprep.subr.mxu0 0.0
    %1011 = vmatpush1.msra.mxu0 0.0
    %1012 = vmatprep.subr.mxu0 0.0
    %1013 = vmatpush1.msra.mxu0 0.0
    %1014 = vmatprep.subr.mxu0 0.0
    %1015 = vmatpush1.msra.mxu0 0.0
    %1016 = vmatprep.subr.mxu0 0.0
    %1017 = vmatpush1.msra.mxu0 0.0
    %1018 = vmatprep.subr.mxu0 0.0
    %1019 = vmatpush1.msra.mxu0 0.0
    %1020 = vmatprep.subr.mxu0 0.0
    %1021 = vmatpush1.msra.mxu0 0.0
    %1022 = vmatprep.subr.mxu0 0.0
    %1023 = vmatpush1.msra.mxu0 0.0
    %1024 = vmatprep.subr.mxu0 0.0
    %1025 = vmatpush1.msra.mxu0 0.0
    %1026 = vmatprep.subr.mxu0 0.0
    %1027 = vmatpush1.msra.mxu0 0.0
    %1028 = vmatprep.subr.mxu0 0.0
    %1029 = vmatpush1.msra.mxu0 0.0
    %1030 = vmatprep.subr.mxu0 0.0
    %1031 = vmatpush1.msra.mxu0 0.0
    %1032 = vmatprep.subr.mxu0 0.0
    %1033 = vmatpush1.msra.mxu0 0.0
    %1034 = vmatprep.subr.mxu0 0.0
    %1035 = vmatpush1.msra.mxu0 0.0
    %1036 = vmatprep.subr.mxu0 0.0
    %1037 = vmatpush1.msra.mxu0 0.0
    %1038 = vmatprep.subr.mxu0 0.0
    %1039 = vmatpush1.msra.mxu0 0.0
    %1040 = vmatprep.subr.mxu0 0.0
    %1041 = vmatpush1.msra.mxu0 0.0
    %1042 = vmatprep.subr.mxu0 0.0
    %1043 = vmatpush1.msra.mxu0 0.0
    %1044 = vmatprep.subr.mxu0 0.0
    %1045 = vmatpush1.msra.mxu0 0.0
    %1046 = vmatprep.subr.mxu0 0.0
    %1047 = vmatpush1.msra.mxu0 0.0
    %1048 = vmatprep.mubr.f32.mxu0 0.0
    %1049 = vmatmul.mubr.f32.gmra.mrb[0].mxu0 %v979
    %v1050 = vpop.f32.mrb[0].mxu0
    %v1051 = vadd.f32 0.0, %v1050
    %v1052 = vpop.f32.mrb[0].mxu0
    %1053 = vmatprep.mubr.f32.mxu0 0.0
    %1054 = vmatmul.mubr.f32.gmra.mrb[0].mxu0 %v982
    %v1055 = vpop.f32.mrb[0].mxu0
    %v1056 = vadd.f32 0.0, %v1055
    %v1057 = vpop.f32.mrb[0].mxu0
    %1058 = vdwg.mxu0
    %v1060 = vsel %vm36, %v974, 0
    %v1063 = vsel %vm36, %v975, 0
    %1065 = vmatprep.subr.mxu0 0.0
    %1066 = vmatpush1.msra.mxu0 %v966
    %1067 = vmatprep.subr.mxu0 0.0
    %1068 = vmatpush1.msra.mxu0 %v967
    %1069 = vmatprep.subr.mxu0 0.0
    %1070 = vmatpush1.msra.mxu0 %v968
    %1071 = vmatprep.subr.mxu0 0.0
    %1072 = vmatpush1.msra.mxu0 %v969
    %1073 = vmatprep.subr.mxu0 0.0
    %1074 = vmatpush1.msra.mxu0 0.0
    %1075 = vmatprep.subr.mxu0 0.0
    %1076 = vmatpush1.msra.mxu0 0.0
    %1077 = vmatprep.subr.mxu0 0.0
    %1078 = vmatpush1.msra.mxu0 0.0
    %1079 = vmatprep.subr.mxu0 0.0
    %1080 = vmatpush1.msra.mxu0 0.0
    %1081 = vmatprep.subr.mxu0 0.0
    %1082 = vmatpush1.msra.mxu0 0.0
    %1083 = vmatprep.subr.mxu0 0.0
    %1084 = vmatpush1.msra.mxu0 0.0
    %1085 = vmatprep.subr.mxu0 0.0
    %1086 = vmatpush1.msra.mxu0 0.0
    %1087 = vmatprep.subr.mxu0 0.0
    %1088 = vmatpush1.msra.mxu0 0.0
    %1089 = vmatprep.subr.mxu0 0.0
    %1090 = vmatpush1.msra.mxu0 0.0
    %1091 = vmatprep.subr.mxu0 0.0
    %1092 = vmatpush1.msra.mxu0 0.0
    %1093 = vmatprep.subr.mxu0 0.0
    %1094 = vmatpush1.msra.mxu0 0.0
    %1095 = vmatprep.subr.mxu0 0.0
    %1096 = vmatpush1.msra.mxu0 0.0
    %1097 = vmatprep.subr.mxu0 0.0
    %1098 = vmatpush1.msra.mxu0 0.0
    %1099 = vmatprep.subr.mxu0 0.0
    %1100 = vmatpush1.msra.mxu0 0.0
    %1101 = vmatprep.subr.mxu0 0.0
    %1102 = vmatpush1.msra.mxu0 0.0
    %1103 = vmatprep.subr.mxu0 0.0
    %1104 = vmatpush1.msra.mxu0 0.0
    %1105 = vmatprep.subr.mxu0 0.0
    %1106 = vmatpush1.msra.mxu0 0.0
    %1107 = vmatprep.subr.mxu0 0.0
    %1108 = vmatpush1.msra.mxu0 0.0
    %1109 = vmatprep.subr.mxu0 0.0
    %1110 = vmatpush1.msra.mxu0 0.0
    %1111 = vmatprep.subr.mxu0 0.0
    %1112 = vmatpush1.msra.mxu0 0.0
    %1113 = vmatprep.subr.mxu0 0.0
    %1114 = vmatpush1.msra.mxu0 0.0
    %1115 = vmatprep.subr.mxu0 0.0
    %1116 = vmatpush1.msra.mxu0 0.0
    %1117 = vmatprep.subr.mxu0 0.0
    %1118 = vmatpush1.msra.mxu0 0.0
    %1119 = vmatprep.subr.mxu0 0.0
    %1120 = vmatpush1.msra.mxu0 0.0
    %1121 = vmatprep.subr.mxu0 0.0
    %1122 = vmatpush1.msra.mxu0 0.0
    %1123 = vmatprep.subr.mxu0 0.0
    %1124 = vmatpush1.msra.mxu0 0.0
    %1125 = vmatprep.subr.mxu0 0.0
    %1126 = vmatpush1.msra.mxu0 0.0
    %1127 = vmatprep.subr.mxu0 0.0
    %1128 = vmatpush1.msra.mxu0 0.0
    %1129 = vmatprep.mubr.f32.mxu0 0.0
    %1130 = vmatmul.mubr.f32.gmra.mrb[0].mxu0 %v1060
    %v1131 = vpop.f32.mrb[0].mxu0
    %v1132 = vadd.f32 %v1051, %v1131
    %v1133 = vpop.f32.mrb[0].mxu0
    %1134 = vmatprep.mubr.f32.mxu0 0.0
    %1135 = vmatmul.mubr.f32.gmra.mrb[0].mxu0 %v1063
    %v1136 = vpop.f32.mrb[0].mxu0
    %v1137 = vadd.f32 %v1056, %v1136
    %v1138 = vpop.f32.mrb[0].mxu0
    %1139 = vdwg.mxu0
    %s1140 = scalar_lea.vmem %s3, 32
    %v1141 = vld [vmem:[%s1140] sm:$0xff]
    %v1142 = vld [vmem:[%s1140 + $0x8] sm:$0xff]
    %v1143 = vld [vmem:[%s1140 + $0x10] sm:$0xff]
    %v1144 = vld [vmem:[%s1140 + $0x18] sm:$0xff]
    %v1146 = vsel %vm36, %v1132, 0
    %v1149 = vsel %vm36, %v1137, 0
    %1151 = vmatprep.subr.mxu0 0.0
    %1152 = vmatpush1.msra.mxu0 %v1141
    %1153 = vmatprep.subr.mxu0 0.0
    %1154 = vmatpush1.msra.mxu0 %v1142
    %1155 = vmatprep.subr.mxu0 0.0
    %1156 = vmatpush1.msra.mxu0 %v1143
    %1157 = vmatprep.subr.mxu0 0.0
    %1158 = vmatpush1.msra.mxu0 %v1144
    %1159 = vmatprep.subr.mxu0 0.0
    %1160 = vmatpush1.msra.mxu0 0.0
    %1161 = vmatprep.subr.mxu0 0.0
    %1162 = vmatpush1.msra.mxu0 0.0
    %1163 = vmatprep.subr.mxu0 0.0
    %1164 = vmatpush1.msra.mxu0 0.0
    %1165 = vmatprep.subr.mxu0 0.0
    %1166 = vmatpush1.msra.mxu0 0.0
    %1167 = vmatprep.subr.mxu0 0.0
    %1168 = vmatpush1.msra.mxu0 0.0
    %1169 = vmatprep.subr.mxu0 0.0
    %1170 = vmatpush1.msra.mxu0 0.0
    %1171 = vmatprep.subr.mxu0 0.0
    %1172 = vmatpush1.msra.mxu0 0.0
    %1173 = vmatprep.subr.mxu0 0.0
    %1174 = vmatpush1.msra.mxu0 0.0
    %1175 = vmatprep.subr.mxu0 0.0
    %1176 = vmatpush1.msra.mxu0 0.0
    %1177 = vmatprep.subr.mxu0 0.0
    %1178 = vmatpush1.msra.mxu0 0.0
    %1179 = vmatprep.subr.mxu0 0.0
    %1180 = vmatpush1.msra.mxu0 0.0
    %1181 = vmatprep.subr.mxu0 0.0
    %1182 = vmatpush1.msra.mxu0 0.0
    %1183 = vmatprep.subr.mxu0 0.0
    %1184 = vmatpush1.msra.mxu0 0.0
    %1185 = vmatprep.subr.mxu0 0.0
    %1186 = vmatpush1.msra.mxu0 0.0
    %1187 = vmatprep.subr.mxu0 0.0
    %1188 = vmatpush1.msra.mxu0 0.0
    %1189 = vmatprep.subr.mxu0 0.0
    %1190 = vmatpush1.msra.mxu0 0.0
    %1191 = vmatprep.subr.mxu0 0.0
    %1192 = vmatpush1.msra.mxu0 0.0
    %1193 = vmatprep.subr.mxu0 0.0
    %1194 = vmatpush1.msra.mxu0 0.0
    %1195 = vmatprep.subr.mxu0 0.0
    %1196 = vmatpush1.msra.mxu0 0.0
    %1197 = vmatprep.subr.mxu0 0.0
    %1198 = vmatpush1.msra.mxu0 0.0
    %1199 = vmatprep.subr.mxu0 0.0
    %1200 = vmatpush1.msra.mxu0 0.0
    %1201 = vmatprep.subr.mxu0 0.0
    %1202 = vmatpush1.msra.mxu0 0.0
    %1203 = vmatprep.subr.mxu0 0.0
    %1204 = vmatpush1.msra.mxu0 0.0
    %1205 = vmatprep.subr.mxu0 0.0
    %1206 = vmatpush1.msra.mxu0 0.0
    %1207 = vmatprep.subr.mxu0 0.0
    %1208 = vmatpush1.msra.mxu0 0.0
    %1209 = vmatprep.subr.mxu0 0.0
    %1210 = vmatpush1.msra.mxu0 0.0
    %1211 = vmatprep.subr.mxu0 0.0
    %1212 = vmatpush1.msra.mxu0 0.0
    %1213 = vmatprep.subr.mxu0 0.0
    %1214 = vmatpush1.msra.mxu0 0.0
    %1215 = vmatprep.mubr.f32.mxu0 0.0
    %1216 = vmatmul.mubr.f32.gmra.mrb[0].mxu0 %v1146
    %v1217 = vpop.f32.mrb[0].mxu0
    %v1218 = vadd.f32 0.0, %v1217
    %v1219 = vpop.f32.mrb[0].mxu0
    %1220 = vmatprep.mubr.f32.mxu0 0.0
    %1221 = vmatmul.mubr.f32.gmra.mrb[0].mxu0 %v1149
    %v1222 = vpop.f32.mrb[0].mxu0
    %v1223 = vadd.f32 0.0, %v1222
    %v1224 = vpop.f32.mrb[0].mxu0
    %1225 = vdwg.mxu0
    %s1226 = scalar_lea.vmem %s6, 64
    %v1227 = vld [vmem:[%s1226] sm:$0xff]
    %v1228 = vld [vmem:[%s1226 + $0x8] sm:$0xff]
    %v1229 = vld [vmem:[%s1226 + $0x10] sm:$0xff]
    %v1230 = vld [vmem:[%s1226 + $0x18] sm:$0xff]
    %s1231 = scalar_lea.vmem %s7, 32
    %v1232 = vld [vmem:[%s1231] sm:$0xff]
    %v1233 = vld [vmem:[%s1231 + $0x8] sm:$0xff]
    %1234 = vst.msk [vmem:[#allocation2] sm:$0xff] %vm124, %v1218
    %1236 = vrot.lane.b32.xlu0 %v1218, 112
    %v1237 = vpop.permute.xlu0 %1236
    %1239 = vst.msk [vmem:[#allocation2 + $0x8] sm:$0xff] %vm124, %v1237
    %1240 = vrot.lane.b32.xlu0 %v1218, 96
    %v1241 = vpop.permute.xlu0 %1240
    %1243 = vst.msk [vmem:[#allocation2 + $0x10] sm:$0xff] %vm124, %v1241
    %1244 = vrot.lane.b32.xlu0 %v1218, 80
    %v1245 = vpop.permute.xlu0 %1244
    %1247 = vst.msk [vmem:[#allocation2 + $0x18] sm:$0xff] %vm124, %v1245
    %v1248 = vld [vmem:[#allocation2] sm:$0xff]
    %v1249 = vld [vmem:[#allocation2 + $0x8] sm:$0xff]
    %v1250 = vld [vmem:[#allocation2 + $0x10] sm:$0xff]
    %v1251 = vld [vmem:[#allocation2 + $0x18] sm:$0xff]
    %1252 = vxpose.xlu0.b32.start [1/16] %v1248, 128
    %1253 = vxpose.xlu0.b32.cont [2/16] %v1249, 128
    %1254 = vxpose.xlu0.b32.cont [3/16] %v1250, 128
    %1255 = vxpose.xlu0.b32.cont [4/16] %v1251, 128
    %1256 = vxpose.xlu0.b32.cont [5/16] 0.0, 128
    %1257 = vxpose.xlu0.b32.cont [6/16] 0.0, 128
    %1258 = vxpose.xlu0.b32.cont [7/16] 0.0, 128
    %1259 = vxpose.xlu0.b32.cont [8/16] 0.0, 128
    %1260 = vxpose.xlu0.b32.cont [9/16] 0.0, 128
    %1261 = vxpose.xlu0.b32.cont [10/16] 0.0, 128
    %1262 = vxpose.xlu0.b32.cont [11/16] 0.0, 128
    %1263 = vxpose.xlu0.b32.cont [12/16] 0.0, 128
    %1264 = vxpose.xlu0.b32.cont [13/16] 0.0, 128
    %1265 = vxpose.xlu0.b32.cont [14/16] 0.0, 128
    %1266 = vxpose.xlu0.b32.cont [15/16] 0.0, 128
    %1267 = vxpose.xlu0.b32.end [16/16] 0.0, 128
    %v1268 = vpop.trf.xlu0
    %v1269 = vpop.trf.xlu0
    %v1270 = vpop.trf.xlu0
    %v1271 = vpop.trf.xlu0
    %v1272 = vpop.trf.xlu0
    %v1273 = vpop.trf.xlu0
    %v1274 = vpop.trf.xlu0
    %v1275 = vpop.trf.xlu0
    %v1276 = vpop.trf.xlu0
    %v1277 = vpop.trf.xlu0
    %v1278 = vpop.trf.xlu0
    %v1279 = vpop.trf.xlu0
    %v1280 = vpop.trf.xlu0
    %v1281 = vpop.trf.xlu0
    %v1282 = vpop.trf.xlu0
    %v1283 = vpop.trf.xlu0
    %v1285 = vsel %vm36, %v1268, 0
    %v1288 = vsel %vm36, %v1269, 0
    %1290 = vmatprep.subr.mxu0 0.0
    %1291 = vmatpush1.msra.mxu0 %v1227
    %1292 = vmatprep.subr.mxu0 0.0
    %1293 = vmatpush1.msra.mxu0 %v1228
    %1294 = vmatprep.subr.mxu0 0.0
    %1295 = vmatpush1.msra.mxu0 %v1229
    %1296 = vmatprep.subr.mxu0 0.0
    %1297 = vmatpush1.msra.mxu0 %v1230
    %1298 = vmatprep.subr.mxu0 0.0
    %1299 = vmatpush1.msra.mxu0 0.0
    %1300 = vmatprep.subr.mxu0 0.0
    %1301 = vmatpush1.msra.mxu0 0.0
    %1302 = vmatprep.subr.mxu0 0.0
    %1303 = vmatpush1.msra.mxu0 0.0
    %1304 = vmatprep.subr.mxu0 0.0
    %1305 = vmatpush1.msra.mxu0 0.0
    %1306 = vmatprep.subr.mxu0 0.0
    %1307 = vmatpush1.msra.mxu0 0.0
    %1308 = vmatprep.subr.mxu0 0.0
    %1309 = vmatpush1.msra.mxu0 0.0
    %1310 = vmatprep.subr.mxu0 0.0
    %1311 = vmatpush1.msra.mxu0 0.0
    %1312 = vmatprep.subr.mxu0 0.0
    %1313 = vmatpush1.msra.mxu0 0.0
    %1314 = vmatprep.subr.mxu0 0.0
    %1315 = vmatpush1.msra.mxu0 0.0
    %1316 = vmatprep.subr.mxu0 0.0
    %1317 = vmatpush1.msra.mxu0 0.0
    %1318 = vmatprep.subr.mxu0 0.0
    %1319 = vmatpush1.msra.mxu0 0.0
    %1320 = vmatprep.subr.mxu0 0.0
    %1321 = vmatpush1.msra.mxu0 0.0
    %1322 = vmatprep.subr.mxu0 0.0
    %1323 = vmatpush1.msra.mxu0 0.0
    %1324 = vmatprep.subr.mxu0 0.0
    %1325 = vmatpush1.msra.mxu0 0.0
    %1326 = vmatprep.subr.mxu0 0.0
    %1327 = vmatpush1.msra.mxu0 0.0
    %1328 = vmatprep.subr.mxu0 0.0
    %1329 = vmatpush1.msra.mxu0 0.0
    %1330 = vmatprep.subr.mxu0 0.0
    %1331 = vmatpush1.msra.mxu0 0.0
    %1332 = vmatprep.subr.mxu0 0.0
    %1333 = vmatpush1.msra.mxu0 0.0
    %1334 = vmatprep.subr.mxu0 0.0
    %1335 = vmatpush1.msra.mxu0 0.0
    %1336 = vmatprep.subr.mxu0 0.0
    %1337 = vmatpush1.msra.mxu0 0.0
    %1338 = vmatprep.subr.mxu0 0.0
    %1339 = vmatpush1.msra.mxu0 0.0
    %1340 = vmatprep.subr.mxu0 0.0
    %1341 = vmatpush1.msra.mxu0 0.0
    %1342 = vmatprep.subr.mxu0 0.0
    %1343 = vmatpush1.msra.mxu0 0.0
    %1344 = vmatprep.subr.mxu0 0.0
    %1345 = vmatpush1.msra.mxu0 0.0
    %1346 = vmatprep.subr.mxu0 0.0
    %1347 = vmatpush1.msra.mxu0 0.0
    %1348 = vmatprep.subr.mxu0 0.0
    %1349 = vmatpush1.msra.mxu0 0.0
    %1350 = vmatprep.subr.mxu0 0.0
    %1351 = vmatpush1.msra.mxu0 0.0
    %1352 = vmatprep.subr.mxu0 0.0
    %1353 = vmatpush1.msra.mxu0 0.0
    %1354 = vmatprep.mubr.f32.mxu0 0.0
    %1355 = vmatmul.mubr.f32.gmra.mrb[0].mxu0 %v1285
    %v1356 = vpop.f32.mrb[0].mxu0
    %v1357 = vadd.f32 %v1232, %v1356
    %v1358 = vpop.f32.mrb[0].mxu0
    %1359 = vmatprep.mubr.f32.mxu0 0.0
    %1360 = vmatmul.mubr.f32.gmra.mrb[0].mxu0 %v1288
    %v1361 = vpop.f32.mrb[0].mxu0
    %v1362 = vadd.f32 %v1233, %v1361
    %v1363 = vpop.f32.mrb[0].mxu0
    %1364 = vdwg.mxu0
    %v1365 = vmul.f32 %v1357, 0.125
    %v1366 = vmul.f32 %v1362, 0.125
    %v1367 = vmul.f32 %v1365, %v1357
    %v1368 = vmul.f32 %v1366, %v1362
    %v1369 = vmul.f32 %v1357, 0.25
    %v1370 = vmul.f32 %v1362, 0.25
    %v1371 = vadd.f32 %v1367, %v1369
    %v1372 = vadd.f32 %v1368, %v1370
    %v1373 = vadd.f32 %v1371, 0.5
    %v1374 = vadd.f32 %v1372, 0.5
    %1375 = vst.msk [vmem:[#allocation3] sm:$0xff] %vm36, %v1373
    %1376 = vst.msk [vmem:[%s267] sm:$0xff] %vm36, %v1374
    %1377 = vst.msk [vmem:[#allocation2] sm:$0xff] %vm124, %v1223
    %1379 = vrot.lane.b32.xlu0 %v1223, 112
    %v1380 = vpop.permute.xlu0 %1379
    %1382 = vst.msk [vmem:[#allocation2 + $0x8] sm:$0xff] %vm124, %v1380
    %1383 = vrot.lane.b32.xlu0 %v1223, 96
    %v1384 = vpop.permute.xlu0 %1383
    %1386 = vst.msk [vmem:[#allocation2 + $0x10] sm:$0xff] %vm124, %v1384
    %1387 = vrot.lane.b32.xlu0 %v1223, 80
    %v1388 = vpop.permute.xlu0 %1387
    %1390 = vst.msk [vmem:[#allocation2 + $0x18] sm:$0xff] %vm124, %v1388
    %v1391 = vld [vmem:[#allocation2] sm:$0xff]
    %v1392 = vld [vmem:[#allocation2 + $0x8] sm:$0xff]
    %v1393 = vld [vmem:[#allocation2 + $0x10] sm:$0xff]
    %v1394 = vld [vmem:[#allocation2 + $0x18] sm:$0xff]
    %1395 = vxpose.xlu0.b32.start [1/16] %v1391, 128
    %1396 = vxpose.xlu0.b32.cont [2/16] %v1392, 128
    %1397 = vxpose.xlu0.b32.cont [3/16] %v1393, 128
    %1398 = vxpose.xlu0.b32.cont [4/16] %v1394, 128
    %1399 = vxpose.xlu0.b32.cont [5/16] 0.0, 128
    %1400 = vxpose.xlu0.b32.cont [6/16] 0.0, 128
    %1401 = vxpose.xlu0.b32.cont [7/16] 0.0, 128
    %1402 = vxpose.xlu0.b32.cont [8/16] 0.0, 128
    %1403 = vxpose.xlu0.b32.cont [9/16] 0.0, 128
    %1404 = vxpose.xlu0.b32.cont [10/16] 0.0, 128
    %1405 = vxpose.xlu0.b32.cont [11/16] 0.0, 128
    %1406 = vxpose.xlu0.b32.cont [12/16] 0.0, 128
    %1407 = vxpose.xlu0.b32.cont [13/16] 0.0, 128
    %1408 = vxpose.xlu0.b32.cont [14/16] 0.0, 128
    %1409 = vxpose.xlu0.b32.cont [15/16] 0.0, 128
    %1410 = vxpose.xlu0.b32.end [16/16] 0.0, 128
    %v1411 = vpop.trf.xlu0
    %v1412 = vpop.trf.xlu0
    %v1413 = vpop.trf.xlu0
    %v1414 = vpop.trf.xlu0
    %v1415 = vpop.trf.xlu0
    %v1416 = vpop.trf.xlu0
    %v1417 = vpop.trf.xlu0
    %v1418 = vpop.trf.xlu0
    %v1419 = vpop.trf.xlu0
    %v1420 = vpop.trf.xlu0
    %v1421 = vpop.trf.xlu0
    %v1422 = vpop.trf.xlu0
    %v1423 = vpop.trf.xlu0
    %v1424 = vpop.trf.xlu0
    %v1425 = vpop.trf.xlu0
    %v1426 = vpop.trf.xlu0
    %v1428 = vsel %vm36, %v1411, 0
    %v1431 = vsel %vm36, %v1412, 0
    %1433 = vmatprep.subr.mxu0 0.0
    %1434 = vmatpush1.msra.mxu0 %v1227
    %1435 = vmatprep.subr.mxu0 0.0
    %1436 = vmatpush1.msra.mxu0 %v1228
    %1437 = vmatprep.subr.mxu0 0.0
    %1438 = vmatpush1.msra.mxu0 %v1229
    %1439 = vmatprep.subr.mxu0 0.0
    %1440 = vmatpush1.msra.mxu0 %v1230
    %1441 = vmatprep.subr.mxu0 0.0
    %1442 = vmatpush1.msra.mxu0 0.0
    %1443 = vmatprep.subr.mxu0 0.0
    %1444 = vmatpush1.msra.mxu0 0.0
    %1445 = vmatprep.subr.mxu0 0.0
    %1446 = vmatpush1.msra.mxu0 0.0
    %1447 = vmatprep.subr.mxu0 0.0
    %1448 = vmatpush1.msra.mxu0 0.0
    %1449 = vmatprep.subr.mxu0 0.0
    %1450 = vmatpush1.msra.mxu0 0.0
    %1451 = vmatprep.subr.mxu0 0.0
    %1452 = vmatpush1.msra.mxu0 0.0
    %1453 = vmatprep.subr.mxu0 0.0
    %1454 = vmatpush1.msra.mxu0 0.0
    %1455 = vmatprep.subr.mxu0 0.0
    %1456 = vmatpush1.msra.mxu0 0.0
    %1457 = vmatprep.subr.mxu0 0.0
    %1458 = vmatpush1.msra.mxu0 0.0
    %1459 = vmatprep.subr.mxu0 0.0
    %1460 = vmatpush1.msra.mxu0 0.0
    %1461 = vmatprep.subr.mxu0 0.0
    %1462 = vmatpush1.msra.mxu0 0.0
    %1463 = vmatprep.subr.mxu0 0.0
    %1464 = vmatpush1.msra.mxu0 0.0
    %1465 = vmatprep.subr.mxu0 0.0
    %1466 = vmatpush1.msra.mxu0 0.0
    %1467 = vmatprep.subr.mxu0 0.0
    %1468 = vmatpush1.msra.mxu0 0.0
    %1469 = vmatprep.subr.mxu0 0.0
    %1470 = vmatpush1.msra.mxu0 0.0
    %1471 = vmatprep.subr.mxu0 0.0
    %1472 = vmatpush1.msra.mxu0 0.0
    %1473 = vmatprep.subr.mxu0 0.0
    %1474 = vmatpush1.msra.mxu0 0.0
    %1475 = vmatprep.subr.mxu0 0.0
    %1476 = vmatpush1.msra.mxu0 0.0
    %1477 = vmatprep.subr.mxu0 0.0
    %1478 = vmatpush1.msra.mxu0 0.0
    %1479 = vmatprep.subr.mxu0 0.0
    %1480 = vmatpush1.msra.mxu0 0.0
    %1481 = vmatprep.subr.mxu0 0.0
    %1482 = vmatpush1.msra.mxu0 0.0
    %1483 = vmatprep.subr.mxu0 0.0
    %1484 = vmatpush1.msra.mxu0 0.0
    %1485 = vmatprep.subr.mxu0 0.0
    %1486 = vmatpush1.msra.mxu0 0.0
    %1487 = vmatprep.subr.mxu0 0.0
    %1488 = vmatpush1.msra.mxu0 0.0
    %1489 = vmatprep.subr.mxu0 0.0
    %1490 = vmatpush1.msra.mxu0 0.0
    %1491 = vmatprep.subr.mxu0 0.0
    %1492 = vmatpush1.msra.mxu0 0.0
    %1493 = vmatprep.subr.mxu0 0.0
    %1494 = vmatpush1.msra.mxu0 0.0
    %1495 = vmatprep.subr.mxu0 0.0
    %1496 = vmatpush1.msra.mxu0 0.0
    %1497 = vmatprep.mubr.f32.mxu0 0.0
    %1498 = vmatmul.mubr.f32.gmra.mrb[0].mxu0 %v1428
    %v1499 = vpop.f32.mrb[0].mxu0
    %v1500 = vadd.f32 %v1232, %v1499
    %v1501 = vpop.f32.mrb[0].mxu0
    %1502 = vmatprep.mubr.f32.mxu0 0.0
    %1503 = vmatmul.mubr.f32.gmra.mrb[0].mxu0 %v1431
    %v1504 = vpop.f32.mrb[0].mxu0
    %v1505 = vadd.f32 %v1233, %v1504
    %v1506 = vpop.f32.mrb[0].mxu0
    %1507 = vdwg.mxu0
    %v1508 = vmul.f32 %v1500, 0.125
    %v1509 = vmul.f32 %v1505, 0.125
    %v1510 = vmul.f32 %v1508, %v1500
    %v1511 = vmul.f32 %v1509, %v1505
    %v1512 = vmul.f32 %v1500, 0.25
    %v1513 = vmul.f32 %v1505, 0.25
    %v1514 = vadd.f32 %v1510, %v1512
    %v1515 = vadd.f32 %v1511, %v1513
    %v1516 = vadd.f32 %v1514, 0.5
    %v1517 = vadd.f32 %v1515, 0.5
    %1518 = vst.msk [vmem:[#allocation3 + $0x8] sm:$0xff] %vm36, %v1516
    %1519 = vst.msk [vmem:[%s267 + $0x8] sm:$0xff] %vm36, %v1517
    %v1520 = vld [vmem:[%s4] sm:$0xff]
    %v1521 = vld [vmem:[%s4 + $0x8] sm:$0xff]
    %v1522 = vld [vmem:[%s4 + $0x10] sm:$0xff]
    %v1523 = vld [vmem:[%s4 + $0x18] sm:$0xff]
    %v1524 = vld [vmem:[%s4 + $0x20] sm:$0xff]
    %v1525 = vld [vmem:[%s4 + $0x28] sm:$0xff]
    %v1526 = vld [vmem:[%s4 + $0x30] sm:$0xff]
    %v1527 = vld [vmem:[%s4 + $0x38] sm:$0xff]
    %v1528 = vld [vmem:[#allocation3] sm:$0xff]
    %v1529 = vld [vmem:[#allocation3 + $0x8] sm:$0xff]
    %v1530 = vld [vmem:[%s267] sm:$0xff]
    %v1531 = vld [vmem:[%s267 + $0x8] sm:$0xff]
    %v1533 = vsel %vm36, %v1530, 0
    %v1536 = vsel %vm36, %v1531, 0
    %1538 = vmatprep.subr.mxu0 0.0
    %1539 = vmatpush1.msra.mxu0 %v1524
    %1540 = vmatprep.subr.mxu0 0.0
    %1541 = vmatpush1.msra.mxu0 %v1525
    %1542 = vmatprep.subr.mxu0 0.0
    %1543 = vmatpush1.msra.mxu0 %v1526
    %1544 = vmatprep.subr.mxu0 0.0
    %1545 = vmatpush1.msra.mxu0 %v1527
    %1546 = vmatprep.subr.mxu0 0.0
    %1547 = vmatpush1.msra.mxu0 0.0
    %1548 = vmatprep.subr.mxu0 0.0
    %1549 = vmatpush1.msra.mxu0 0.0
    %1550 = vmatprep.subr.mxu0 0.0
    %1551 = vmatpush1.msra.mxu0 0.0
    %1552 = vmatprep.subr.mxu0 0.0
    %1553 = vmatpush1.msra.mxu0 0.0
    %1554 = vmatprep.subr.mxu0 0.0
    %1555 = vmatpush1.msra.mxu0 0.0
    %1556 = vmatprep.subr.mxu0 0.0
    %1557 = vmatpush1.msra.mxu0 0.0
    %1558 = vmatprep.subr.mxu0 0.0
    %1559 = vmatpush1.msra.mxu0 0.0
    %1560 = vmatprep.subr.mxu0 0.0
    %1561 = vmatpush1.msra.mxu0 0.0
    %1562 = vmatprep.subr.mxu0 0.0
    %1563 = vmatpush1.msra.mxu0 0.0
    %1564 = vmatprep.subr.mxu0 0.0
    %1565 = vmatpush1.msra.mxu0 0.0
    %1566 = vmatprep.subr.mxu0 0.0
    %1567 = vmatpush1.msra.mxu0 0.0
    %1568 = vmatprep.subr.mxu0 0.0
    %1569 = vmatpush1.msra.mxu0 0.0
    %1570 = vmatprep.subr.mxu0 0.0
    %1571 = vmatpush1.msra.mxu0 0.0
    %1572 = vmatprep.subr.mxu0 0.0
    %1573 = vmatpush1.msra.mxu0 0.0
    %1574 = vmatprep.subr.mxu0 0.0
    %1575 = vmatpush1.msra.mxu0 0.0
    %1576 = vmatprep.subr.mxu0 0.0
    %1577 = vmatpush1.msra.mxu0 0.0
    %1578 = vmatprep.subr.mxu0 0.0
    %1579 = vmatpush1.msra.mxu0 0.0
    %1580 = vmatprep.subr.mxu0 0.0
    %1581 = vmatpush1.msra.mxu0 0.0
    %1582 = vmatprep.subr.mxu0 0.0
    %1583 = vmatpush1.msra.mxu0 0.0
    %1584 = vmatprep.subr.mxu0 0.0
    %1585 = vmatpush1.msra.mxu0 0.0
    %1586 = vmatprep.subr.mxu0 0.0
    %1587 = vmatpush1.msra.mxu0 0.0
    %1588 = vmatprep.subr.mxu0 0.0
    %1589 = vmatpush1.msra.mxu0 0.0
    %1590 = vmatprep.subr.mxu0 0.0
    %1591 = vmatpush1.msra.mxu0 0.0
    %1592 = vmatprep.subr.mxu0 0.0
    %1593 = vmatpush1.msra.mxu0 0.0
    %1594 = vmatprep.subr.mxu0 0.0
    %1595 = vmatpush1.msra.mxu0 0.0
    %1596 = vmatprep.subr.mxu0 0.0
    %1597 = vmatpush1.msra.mxu0 0.0
    %1598 = vmatprep.subr.mxu0 0.0
    %1599 = vmatpush1.msra.mxu0 0.0
    %1600 = vmatprep.subr.mxu0 0.0
    %1601 = vmatpush1.msra.mxu0 0.0
    %1602 = vmatprep.mubr.f32.mxu0 0.0
    %1603 = vmatmul.mubr.f32.gmra.mrb[0].mxu0 %v1533
    %v1604 = vpop.f32.mrb[0].mxu0
    %v1605 = vadd.f32 0.0, %v1604
    %v1606 = vpop.f32.mrb[0].mxu0
    %1607 = vmatprep.mubr.f32.mxu0 0.0
    %1608 = vmatmul.mubr.f32.gmra.mrb[0].mxu0 %v1536
    %v1609 = vpop.f32.mrb[0].mxu0
    %v1610 = vadd.f32 0.0, %v1609
    %v1611 = vpop.f32.mrb[0].mxu0
    %1612 = vdwg.mxu0
    %v1614 = vsel %vm36, %v1528, 0
    %v1617 = vsel %vm36, %v1529, 0
    %1619 = vmatprep.subr.mxu0 0.0
    %1620 = vmatpush1.msra.mxu0 %v1520
    %1621 = vmatprep.subr.mxu0 0.0
    %1622 = vmatpush1.msra.mxu0 %v1521
    %1623 = vmatprep.subr.mxu0 0.0
    %1624 = vmatpush1.msra.mxu0 %v1522
    %1625 = vmatprep.subr.mxu0 0.0
    %1626 = vmatpush1.msra.mxu0 %v1523
    %1627 = vmatprep.subr.mxu0 0.0
    %1628 = vmatpush1.msra.mxu0 0.0
    %1629 = vmatprep.subr.mxu0 0.0
    %1630 = vmatpush1.msra.mxu0 0.0
    %1631 = vmatprep.subr.mxu0 0.0
    %1632 = vmatpush1.msra.mxu0 0.0
    %1633 = vmatprep.subr.mxu0 0.0
    %1634 = vmatpush1.msra.mxu0 0.0
    %1635 = vmatprep.subr.mxu0 0.0
    %1636 = vmatpush1.msra.mxu0 0.0
    %1637 = vmatprep.subr.mxu0 0.0
    %1638 = vmatpush1.msra.mxu0 0.0
    %1639 = vmatprep.subr.mxu0 0.0
    %1640 = vmatpush1.msra.mxu0 0.0
    %1641 = vmatprep.subr.mxu0 0.0
    %1642 = vmatpush1.msra.mxu0 0.0
    %1643 = vmatprep.subr.mxu0 0.0
    %1644 = vmatpush1.msra.mxu0 0.0
    %1645 = vmatprep.subr.mxu0 0.0
    %1646 = vmatpush1.msra.mxu0 0.0
    %1647 = vmatprep.subr.mxu0 0.0
    %1648 = vmatpush1.msra.mxu0 0.0
    %1649 = vmatprep.subr.mxu0 0.0
    %1650 = vmatpush1.msra.mxu0 0.0
    %1651 = vmatprep.subr.mxu0 0.0
    %1652 = vmatpush1.msra.mxu0 0.0
    %1653 = vmatprep.subr.mxu0 0.0
    %1654 = vmatpush1.msra.mxu0 0.0
    %1655 = vmatprep.subr.mxu0 0.0
    %1656 = vmatpush1.msra.mxu0 0.0
    %1657 = vmatprep.subr.mxu0 0.0
    %1658 = vmatpush1.msra.mxu0 0.0
    %1659 = vmatprep.subr.mxu0 0.0
    %1660 = vmatpush1.msra.mxu0 0.0
    %1661 = vmatprep.subr.mxu0 0.0
    %1662 = vmatpush1.msra.mxu0 0.0
    %1663 = vmatprep.subr.mxu0 0.0
    %1664 = vmatpush1.msra.mxu0 0.0
    %1665 = vmatprep.subr.mxu0 0.0
    %1666 = vmatpush1.msra.mxu0 0.0
    %1667 = vmatprep.subr.mxu0 0.0
    %1668 = vmatpush1.msra.mxu0 0.0
    %1669 = vmatprep.subr.mxu0 0.0
    %1670 = vmatpush1.msra.mxu0 0.0
    %1671 = vmatprep.subr.mxu0 0.0
    %1672 = vmatpush1.msra.mxu0 0.0
    %1673 = vmatprep.subr.mxu0 0.0
    %1674 = vmatpush1.msra.mxu0 0.0
    %1675 = vmatprep.subr.mxu0 0.0
    %1676 = vmatpush1.msra.mxu0 0.0
    %1677 = vmatprep.subr.mxu0 0.0
    %1678 = vmatpush1.msra.mxu0 0.0
    %1679 = vmatprep.subr.mxu0 0.0
    %1680 = vmatpush1.msra.mxu0 0.0
    %1681 = vmatprep.subr.mxu0 0.0
    %1682 = vmatpush1.msra.mxu0 0.0
    %1683 = vmatprep.mubr.f32.mxu0 0.0
    %1684 = vmatmul.mubr.f32.gmra.mrb[0].mxu0 %v1614
    %v1685 = vpop.f32.mrb[0].mxu0
    %v1686 = vadd.f32 %v1605, %v1685
    %v1687 = vpop.f32.mrb[0].mxu0
    %1688 = vmatprep.mubr.f32.mxu0 0.0
    %1689 = vmatmul.mubr.f32.gmra.mrb[0].mxu0 %v1617
    %v1690 = vpop.f32.mrb[0].mxu0
    %v1691 = vadd.f32 %v1610, %v1690
    %v1692 = vpop.f32.mrb[0].mxu0
    %1693 = vdwg.mxu0
    %v1694 = vld [vmem:[%s5] sm:$0x1]
    %v1696 = vlaneseq
    %v1697 = vshrl.u32 %v1696, 7
    %v1698 = vsub.s32 0, %v1697
    %v1699 = vrot.slane %v1694, %v1698
    %v1701 = vadd.f32 %v1686, %v1699
    %v1702 = vadd.f32 %v1691, %v1699
    %1703 = vst.msk [vmem:[#allocation4] sm:$0xff] %vm36, %v1701
    %1704 = vst.msk [vmem:[#allocation4 + $0x8] sm:$0xff] %vm36, %v1702
    // Predicated region
    $region34: #{bert_base_flatten_forward.1} parent=1 // pred_check
      _
    $region35: #{bert_base_flatten_forward.1} parent=1 // pred_check_branch
      %1706 = sbr.rel (0) target = $region37
    $region36: #{bert_base_flatten_forward.1} parent=1 // pred_region
      %s1708 = ssub.s32 256, 256
      %1709 = vsyncadd [#allocation5], %s1708
      %s1710 = sshll.u32 [#allocation4], 4
      %s1711 = int_to_ptr.vmem [resolvable:$true] %s1710
      %1716 = dma.vmem_to_hbm [thread:$0]  %s1711, 256, %s8, [#allocation5], 128, 128, 8
    $region37: #{bert_base_flatten_forward.1} parent=1 // pred_fallthru
      _
    // Predicated region
    $region38: #{bert_base_flatten_forward.1} parent=1 // pred_check
      _
    $region39: #{bert_base_flatten_forward.1} parent=1 // pred_check_branch
      %1718 = sbr.rel (0) target = $region41
    $region40: #{bert_base_flatten_forward.1} parent=1 // pred_region
      %1719 = dma.done [#allocation5], 256
    $region41: #{bert_base_flatten_forward.1} parent=1 // pred_fallthru
      _
    %1720 = vsyncpa [#allocation5], 1

</llo_original>
